<compile_context>
chip_gen: v6e
topology: v6e:2x2x1
jax: 0.10.0
libtpu: 0.0.40
codegen_flags: <defaults>
</compile_context>

<pallas_src>
import functools
import math

import jax
import jax.numpy as jnp
from jax import lax
from jax.experimental import pallas as pl
from jax.experimental.pallas import tpu as pltpu


# ----------------------------------------------------------------------------
# Pallas kernel: 1x1 p4p4 group conv + bias + full LayerNorm, BT samples / step
# ----------------------------------------------------------------------------
def _primary_caps_kernel(x_ref, w_ref, bias_ref, gamma_ref, beta_ref, o_ref, y_ref,
                         *, eps, inv_n, row_chunk):
    # x_ref:     (BT, K, HW) f32   activations (K = Ci*4), pure view of the input
    # w_ref:     (N, K)      bf16  expanded 1x1 p4 group-conv weight (N = Co*4), resident
    # bias_ref:  (N, 1)      f32   conv bias (per out channel, repeated over rotations)
    # gamma_ref: (N, HW)     f32   LayerNorm weight, resident
    # beta_ref:  (N, HW)     f32   LayerNorm bias,  resident
    # o_ref:     (BT, N, HW) bf16 (or f32) fused output
    # y_ref:     (BT, N, HW) f32   VMEM scratch holding the pre-norm conv output
    bt, n_rows, _ = o_ref.shape
    n_chunks = n_rows // row_chunk

    def _sum12(a):  # reduce over (rows, lanes), keep (BT, 1, 1)
        return jnp.sum(jnp.sum(a, axis=2, keepdims=True), axis=1, keepdims=True)

    # --- 1x1 p4p4 group conv: one (N,K)@(K,HW) MXU matmul per sample --------------
    for b in range(bt):                                   # static, small
        xb = x_ref[b].astype(jnp.bfloat16)                # in-kernel bf16 cast
        y_ref[b] = jnp.dot(w_ref[...], xb,
                           preferred_element_type=jnp.float32) + bias_ref[...]

    # --- LayerNorm over the whole (Co,4,H,W) slab of each sample ------------------
    # Two-pass centered statistics in f32, streamed in row chunks off the scratch.
    tot = jnp.zeros((bt, 1, 1), jnp.float32)
    for c in range(n_chunks):
        rows = pl.ds(c * row_chunk, row_chunk)
        tot = tot + _sum12(y_ref[:, rows, :])
    mean = tot * inv_n                                    # (BT, 1, 1)

    ssq = jnp.zeros((bt, 1, 1), jnp.float32)
    for c in range(n_chunks):
        rows = pl.ds(c * row_chunk, row_chunk)
        yc = y_ref[:, rows, :] - mean
        ssq = ssq + _sum12(yc * yc)
    inv = lax.rsqrt(ssq * inv_n + eps)                    # (BT, 1, 1)

    # --- normalize + affine, chunked so (y, gamma, beta, out) stay in registers ---
    for c in range(n_chunks):
        rows = pl.ds(c * row_chunk, row_chunk)
        yc = y_ref[:, rows, :] - mean
        g = gamma_ref[rows, :][None]
        bta = beta_ref[rows, :][None]
        o_ref[:, rows, :] = (yc * inv * g + bta).astype(o_ref.dtype)


# ----------------------------------------------------------------------------
# Parameter preparation (hoisted out of the forward path)
# ----------------------------------------------------------------------------
def p4p4_expand_1x1_rows(w):
    """(Co, Ci, 4, 1, 1) -> (Co*4, Ci*4) matmul weight (output rows, input lanes).

    w_t[o*4 + r, i*4 + s] = w[o, i, (s - r) % 4, 0, 0]
    (spatial rot90 of a 1x1 kernel is the identity)."""
    Co, Ci = w.shape[0], w.shape[1]
    w = w[:, :, :, 0, 0]                                   # (Co, Ci, 4)
    rots = []
    for r in range(4):
        perm = [(s - r) % 4 for s in range(4)]
        rots.append(w[:, :, perm])                         # indexed by s -> (s-r)%4
    w4 = jnp.stack(rots, axis=1)                           # (Co, 4, Ci, 4) = [o, r, i, s]
    return w4.reshape(Co * 4, Ci * 4)                      # pure reshape, no transpose


def prepare_params(w, bias, gamma, beta):
    """Precompute expanded / reshaped parameter matrices once (static per step)."""
    Co = w.shape[0]
    H, W = gamma.shape[2], gamma.shape[3]
    w_t = p4p4_expand_1x1_rows(w).astype(jnp.bfloat16)                    # (Co*4, Ci*4)
    bias_col = jnp.repeat(bias.astype(jnp.float32), 4).reshape(Co * 4, 1)
    gamma_mat = gamma.reshape(Co * 4, H * W).astype(jnp.float32)          # pure view
    beta_mat = beta.reshape(Co * 4, H * W).astype(jnp.float32)            # pure view
    return dict(w_t=w_t, bias_col=bias_col, gamma_mat=gamma_mat, beta_mat=beta_mat)


# ----------------------------------------------------------------------------
# Batch tile selection
# ----------------------------------------------------------------------------
def _pick_block_batch(B, K, N, HW):
    """Samples per grid step: amortize the ~0.35us/step overhead, keep >= 2 grid
    steps when the batch allows (v7x has two TensorCores), and stay well inside the
    VMEM scoped limit on every generation (v7x: 32 MiB default / 64 MiB physical)."""
    # double-buffered x(f32) + out(bf16) tiles, plus the single f32 y scratch slab
    bytes_per_sample = 2 * (K * HW * 4) + 2 * (N * HW * 2) + N * HW * 4
    vmem_budget = 20 << 20
    max_bt = max(1, vmem_budget // bytes_per_sample)
    target = B if B == 1 else max(1, B // 2)
    bt = int(min(target, max_bt, B))
    while B % bt:            # exact blocks: LN statistics must never see padding
        bt -= 1
    return bt


# ----------------------------------------------------------------------------
# Forward wrapper
# ----------------------------------------------------------------------------
def primary_capsules_forward(x, prep, num_capsules, out_dim, eps=1e-5,
                             out_dtype=jnp.bfloat16):
    """x: (B, Ci, 4, H, W) f32 -> (B, num_capsules, out_dim, 4, H, W) out_dtype."""
    B, Ci, G, H, W = x.shape
    assert G == 4
    Co = num_capsules * out_dim
    K, N, HW = Ci * 4, Co * 4, H * W
    assert HW % 128 == 0 and N % 8 == 0 and K % 8 == 0, \
        "keep the per-sample (rows=C*4, lanes=H*W) slab tile-aligned"

    # rows = c*4 + r, lanes = h*W + w  ->  pure reshape view, no transpose pass.
    x_mat = x.reshape(B, K, HW)

    bt = _pick_block_batch(B, K, N, HW)
    row_chunk = math.gcd(N, 32)

    kern = functools.partial(_primary_caps_kernel, eps=float(eps),
                             inv_n=1.0 / float(N * HW), row_chunk=row_chunk)

    out = pl.pallas_call(
        kern,
        out_shape=jax.ShapeDtypeStruct((B, N, HW), out_dtype),
        grid=(B // bt,),
        in_specs=[
            pl.BlockSpec((bt, K, HW), lambda i: (i, 0, 0)),  # per-step activations
            pl.BlockSpec((N, K), lambda i: (0, 0)),          # weights: VMEM-resident
            pl.BlockSpec((N, 1), lambda i: (0, 0)),          # conv bias (resident)
            pl.BlockSpec((N, HW), lambda i: (0, 0)),         # LN gamma (resident)
            pl.BlockSpec((N, HW), lambda i: (0, 0)),         # LN beta  (resident)
        ],
        out_specs=pl.BlockSpec((bt, N, HW), lambda i: (i, 0, 0)),
        scratch_shapes=[pltpu.VMEM((bt, N, HW), jnp.float32)],
        compiler_params=pltpu.CompilerParams(
            dimension_semantics=("parallel",)),              # batch -> megacore split
    )(x_mat, prep['w_t'], prep['bias_col'], prep['gamma_mat'], prep['beta_mat'])

    # rows n = (cap*out_dim + d)*4 + r  ->  pure reshape view to the capsule layout
    # (matches PyTorch .view(-1, num_capsules, out_dim, 4, H, W)).
    return out.reshape(B, num_capsules, out_dim, 4, H, W)


# ----------------------------------------------------------------------------
# Pure-JAX f32 reference (independent of the Pallas layout code)
# ----------------------------------------------------------------------------
def primary_capsules_ref(x, w, bias, gamma, beta, num_capsules, out_dim, eps=1e-5):
    B, Ci, _, H, W = x.shape
    ws = w[:, :, :, 0, 0]                                   # (Co, Ci, 4)
    outs = []
    for r in range(4):
        wr = ws[:, :, [(s - r) % 4 for s in range(4)]]      # (Co, Ci, 4)
        outs.append(jnp.einsum('bishw,ois->bohw', x, wr,
                               precision=lax.Precision.HIGHEST))
    y = jnp.stack(outs, axis=2)                             # (B, Co, 4, H, W)
    y = y + bias[None, :, None, None, None]

    mu = y.mean(axis=(1, 2, 3, 4), keepdims=True)
    var = ((y - mu) ** 2).mean(axis=(1, 2, 3, 4), keepdims=True)
    z = (y - mu) / jnp.sqrt(var + eps) * gamma[None] + beta[None]
    return z.reshape(B, num_capsules, out_dim, 4, H, W)


# ----------------------------------------------------------------------------
if __name__ == "__main__":
    key = jax.random.PRNGKey(0)
    kx, kw, kb, kg, kbe = jax.random.split(key, 5)

    # Small shapes consistent with the module (defaults H=16, W=16).
    B, Ci, H, W = 2, 32, 16, 16
    num_capsules, out_dim = 8, 4
    Co = num_capsules * out_dim

    x = jax.random.normal(kx, (B, Ci, 4, H, W), jnp.float32)
    w = jax.random.normal(kw, (Co, Ci, 4, 1, 1), jnp.float32) * jnp.sqrt(2.0 / (Ci * 4))
    bias = 0.1 * jax.random.normal(kb, (Co,), jnp.float32)
    gamma = 1.0 + 0.1 * jax.random.normal(kg, (Co, 4, H, W), jnp.float32)
    beta = 0.1 * jax.random.normal(kbe, (Co, 4, H, W), jnp.float32)

    prep = prepare_params(w, bias, gamma, beta)
    fwd = jax.jit(primary_capsules_forward, static_argnums=(2, 3))
    out = fwd(x, prep, num_capsules, out_dim)
    out = jax.block_until_ready(out)
    assert out.shape == (B, num_capsules, out_dim, 4, H, W), out.shape

    ref = primary_capsules_ref(x, w, bias, gamma, beta, num_capsules, out_dim)
    # bf16 MXU operands + bf16 output introduce ~1e-2..3e-2-level max abs error vs
    # the f32 reference (values are O(1..4) after LayerNorm).
    err = float(jnp.max(jnp.abs(out.astype(jnp.float32) - ref)))
    assert err < 8e-2, f"max abs err vs reference: {err}"

    print("KERNEL_OK")
</pallas_src>

<mosaic_0001>
module attributes {stable_mosaic.version = 11 : i64} {
  func.func @_primary_caps_kernel(%arg0: i32, %arg1: memref<1x128x256xf32, #tpu.memory_space<vmem>>, %arg2: memref<128x128xbf16, #tpu.memory_space<vmem>>, %arg3: memref<128x1xf32, #tpu.memory_space<vmem>>, %arg4: memref<128x256xf32, #tpu.memory_space<vmem>>, %arg5: memref<128x256xf32, #tpu.memory_space<vmem>>, %arg6: memref<1x128x256xbf16, #tpu.memory_space<vmem>>, %arg7: memref<1x128x256xf32, #tpu.memory_space<vmem>>) attributes {dimension_semantics = [#tpu.dimension_semantics<parallel>], iteration_bounds = array<i64: 2>, scalar_prefetch = 0 : i64, scratch_operands = 1 : i64, tpu.core_type = #tpu.core_type<tc>, window_params = [{transform_indices = @transform_0, window_bounds = array<i64: 1, 128, 256>}, {pipeline_mode = #tpu.pipeline_mode<synchronous>, transform_indices = @transform_1, window_bounds = array<i64: 128, 128>}, {pipeline_mode = #tpu.pipeline_mode<synchronous>, transform_indices = @transform_2, window_bounds = array<i64: 128, 1>}, {pipeline_mode = #tpu.pipeline_mode<synchronous>, transform_indices = @transform_3, window_bounds = array<i64: 128, 256>}, {pipeline_mode = #tpu.pipeline_mode<synchronous>, transform_indices = @transform_4, window_bounds = array<i64: 128, 256>}, {transform_indices = @transform_5, window_bounds = array<i64: 1, 128, 256>}]} {
    %c0 = arith.constant 0 : index
    %c0_0 = arith.constant 0 : index
    %c0_1 = arith.constant 0 : index
    %0 = vector.load %arg1[%c0, %c0_0, %c0_1] : memref<1x128x256xf32, #tpu.memory_space<vmem>>, vector<1x128x256xf32>
    %1 = vector.shape_cast %0 : vector<1x128x256xf32> to vector<128x256xf32>
    %2 = arith.truncf %1 : vector<128x256xf32> to vector<128x256xbf16>
    %c0_2 = arith.constant 0 : index
    %c0_3 = arith.constant 0 : index
    %3 = vector.load %arg2[%c0_2, %c0_3] : memref<128x128xbf16, #tpu.memory_space<vmem>>, vector<128x128xbf16>
    %cst = arith.constant dense<0.000000e+00> : vector<128x256xf32>
    %4 = tpu.matmul %3, %2, %cst {dimension_numbers = #tpu.dot_dimension_numbers<[1], [0], [0], [1], [0, 0, 1, 1], [], []>} : vector<128x128xbf16>, vector<128x256xbf16>, vector<128x256xf32> -> vector<128x256xf32>
    %c0_4 = arith.constant 0 : index
    %c0_5 = arith.constant 0 : index
    %5 = vector.load %arg3[%c0_4, %c0_5] : memref<128x1xf32, #tpu.memory_space<vmem>>, vector<128x1xf32>
    %6 = vector.broadcast %5 : vector<128x1xf32> to vector<128x256xf32>
    %7 = arith.addf %4, %6 : vector<128x256xf32>
    %c0_6 = arith.constant 0 : index
    %c0_7 = arith.constant 0 : index
    %c0_8 = arith.constant 0 : index
    %8 = vector.load %arg7[%c0_6, %c0_7, %c0_8] : memref<1x128x256xf32, #tpu.memory_space<vmem>>, vector<1x128x256xf32>
    %9 = vector.shape_cast %8 : vector<1x128x256xf32> to vector<128x256xf32>
    %10 = vector.shape_cast %7 : vector<128x256xf32> to vector<1x128x256xf32>
    tpu.vector_store %arg7[%c0_6, %c0_7, %c0_8], %10 {strides = array<i32>} : memref<1x128x256xf32, #tpu.memory_space<vmem>>, vector<1x128x256xf32>,
    %cst_9 = arith.constant 0.000000e+00 : f32
    %11 = vector.broadcast %cst_9 : f32 to vector<1x1x1xf32>
    %c0_10 = arith.constant 0 : index
    %c0_11 = arith.constant 0 : index
    %c0_12 = arith.constant 0 : index
    %12 = vector.load %arg7[%c0_10, %c0_11, %c0_12] : memref<1x128x256xf32, #tpu.memory_space<vmem>>, vector<1x32x256xf32>
    %cst_13 = arith.constant dense<0.000000e+00> : vector<1x32xf32>
    %13 = vector.multi_reduction <add>, %12, %cst_13 [2] : vector<1x32x256xf32> to vector<1x32xf32>
    %14 = vector.shape_cast %13 : vector<1x32xf32> to vector<1x32x1xf32>
    %cst_14 = arith.constant dense<0.000000e+00> : vector<1x1xf32>
    %15 = vector.multi_reduction <add>, %14, %cst_14 [1] : vector<1x32x1xf32> to vector<1x1xf32>
    %16 = vector.shape_cast %15 : vector<1x1xf32> to vector<1x1x1xf32>
    %17 = arith.addf %11, %16 : vector<1x1x1xf32>
    %c0_15 = arith.constant 0 : index
    %c32 = arith.constant 32 : index
    %c0_16 = arith.constant 0 : index
    %18 = vector.load %arg7[%c0_15, %c32, %c0_16] : memref<1x128x256xf32, #tpu.memory_space<vmem>>, vector<1x32x256xf32>
    %cst_17 = arith.constant dense<0.000000e+00> : vector<1x32xf32>
    %19 = vector.multi_reduction <add>, %18, %cst_17 [2] : vector<1x32x256xf32> to vector<1x32xf32>
    %20 = vector.shape_cast %19 : vector<1x32xf32> to vector<1x32x1xf32>
    %cst_18 = arith.constant dense<0.000000e+00> : vector<1x1xf32>
    %21 = vector.multi_reduction <add>, %20, %cst_18 [1] : vector<1x32x1xf32> to vector<1x1xf32>
    %22 = vector.shape_cast %21 : vector<1x1xf32> to vector<1x1x1xf32>
    %23 = arith.addf %17, %22 : vector<1x1x1xf32>
    %c0_19 = arith.constant 0 : index
    %c64 = arith.constant 64 : index
    %c0_20 = arith.constant 0 : index
    %24 = vector.load %arg7[%c0_19, %c64, %c0_20] : memref<1x128x256xf32, #tpu.memory_space<vmem>>, vector<1x32x256xf32>
    %cst_21 = arith.constant dense<0.000000e+00> : vector<1x32xf32>
    %25 = vector.multi_reduction <add>, %24, %cst_21 [2] : vector<1x32x256xf32> to vector<1x32xf32>
    %26 = vector.shape_cast %25 : vector<1x32xf32> to vector<1x32x1xf32>
    %cst_22 = arith.constant dense<0.000000e+00> : vector<1x1xf32>
    %27 = vector.multi_reduction <add>, %26, %cst_22 [1] : vector<1x32x1xf32> to vector<1x1xf32>
    %28 = vector.shape_cast %27 : vector<1x1xf32> to vector<1x1x1xf32>
    %29 = arith.addf %23, %28 : vector<1x1x1xf32>
    %c0_23 = arith.constant 0 : index
    %c96 = arith.constant 96 : index
    %c0_24 = arith.constant 0 : index
    %30 = vector.load %arg7[%c0_23, %c96, %c0_24] : memref<1x128x256xf32, #tpu.memory_space<vmem>>, vector<1x32x256xf32>
    %cst_25 = arith.constant dense<0.000000e+00> : vector<1x32xf32>
    %31 = vector.multi_reduction <add>, %30, %cst_25 [2] : vector<1x32x256xf32> to vector<1x32xf32>
    %32 = vector.shape_cast %31 : vector<1x32xf32> to vector<1x32x1xf32>
    %cst_26 = arith.constant dense<0.000000e+00> : vector<1x1xf32>
    %33 = vector.multi_reduction <add>, %32, %cst_26 [1] : vector<1x32x1xf32> to vector<1x1xf32>
    %34 = vector.shape_cast %33 : vector<1x1xf32> to vector<1x1x1xf32>
    %35 = arith.addf %29, %34 : vector<1x1x1xf32>
    %cst_27 = arith.constant 3.05175781E-5 : f32
    %36 = vector.broadcast %cst_27 : f32 to vector<1x1x1xf32>
    %37 = arith.mulf %35, %36 : vector<1x1x1xf32>
    %cst_28 = arith.constant 0.000000e+00 : f32
    %38 = vector.broadcast %cst_28 : f32 to vector<1x1x1xf32>
    %c0_29 = arith.constant 0 : index
    %c0_30 = arith.constant 0 : index
    %c0_31 = arith.constant 0 : index
    %39 = vector.load %arg7[%c0_29, %c0_30, %c0_31] : memref<1x128x256xf32, #tpu.memory_space<vmem>>, vector<1x32x256xf32>
    %40 = vector.broadcast %37 : vector<1x1x1xf32> to vector<1x32x256xf32>
    %41 = arith.subf %39, %40 : vector<1x32x256xf32>
    %42 = arith.mulf %41, %41 : vector<1x32x256xf32>
    %cst_32 = arith.constant dense<0.000000e+00> : vector<1x32xf32>
    %43 = vector.multi_reduction <add>, %42, %cst_32 [2] : vector<1x32x256xf32> to vector<1x32xf32>
    %44 = vector.shape_cast %43 : vector<1x32xf32> to vector<1x32x1xf32>
    %cst_33 = arith.constant dense<0.000000e+00> : vector<1x1xf32>
    %45 = vector.multi_reduction <add>, %44, %cst_33 [1] : vector<1x32x1xf32> to vector<1x1xf32>
    %46 = vector.shape_cast %45 : vector<1x1xf32> to vector<1x1x1xf32>
    %47 = arith.addf %38, %46 : vector<1x1x1xf32>
    %c0_34 = arith.constant 0 : index
    %c32_35 = arith.constant 32 : index
    %c0_36 = arith.constant 0 : index
    %48 = vector.load %arg7[%c0_34, %c32_35, %c0_36] : memref<1x128x256xf32, #tpu.memory_space<vmem>>, vector<1x32x256xf32>
    %49 = vector.broadcast %37 : vector<1x1x1xf32> to vector<1x32x256xf32>
    %50 = arith.subf %48, %49 : vector<1x32x256xf32>
    %51 = arith.mulf %50, %50 : vector<1x32x256xf32>
    %cst_37 = arith.constant dense<0.000000e+00> : vector<1x32xf32>
    %52 = vector.multi_reduction <add>, %51, %cst_37 [2] : vector<1x32x256xf32> to vector<1x32xf32>
    %53 = vector.shape_cast %52 : vector<1x32xf32> to vector<1x32x1xf32>
    %cst_38 = arith.constant dense<0.000000e+00> : vector<1x1xf32>
    %54 = vector.multi_reduction <add>, %53, %cst_38 [1] : vector<1x32x1xf32> to vector<1x1xf32>
    %55 = vector.shape_cast %54 : vector<1x1xf32> to vector<1x1x1xf32>
    %56 = arith.addf %47, %55 : vector<1x1x1xf32>
    %c0_39 = arith.constant 0 : index
    %c64_40 = arith.constant 64 : index
    %c0_41 = arith.constant 0 : index
    %57 = vector.load %arg7[%c0_39, %c64_40, %c0_41] : memref<1x128x256xf32, #tpu.memory_space<vmem>>, vector<1x32x256xf32>
    %58 = vector.broadcast %37 : vector<1x1x1xf32> to vector<1x32x256xf32>
    %59 = arith.subf %57, %58 : vector<1x32x256xf32>
    %60 = arith.mulf %59, %59 : vector<1x32x256xf32>
    %cst_42 = arith.constant dense<0.000000e+00> : vector<1x32xf32>
    %61 = vector.multi_reduction <add>, %60, %cst_42 [2] : vector<1x32x256xf32> to vector<1x32xf32>
    %62 = vector.shape_cast %61 : vector<1x32xf32> to vector<1x32x1xf32>
    %cst_43 = arith.constant dense<0.000000e+00> : vector<1x1xf32>
    %63 = vector.multi_reduction <add>, %62, %cst_43 [1] : vector<1x32x1xf32> to vector<1x1xf32>
    %64 = vector.shape_cast %63 : vector<1x1xf32> to vector<1x1x1xf32>
    %65 = arith.addf %56, %64 : vector<1x1x1xf32>
    %c0_44 = arith.constant 0 : index
    %c96_45 = arith.constant 96 : index
    %c0_46 = arith.constant 0 : index
    %66 = vector.load %arg7[%c0_44, %c96_45, %c0_46] : memref<1x128x256xf32, #tpu.memory_space<vmem>>, vector<1x32x256xf32>
    %67 = vector.broadcast %37 : vector<1x1x1xf32> to vector<1x32x256xf32>
    %68 = arith.subf %66, %67 : vector<1x32x256xf32>
    %69 = arith.mulf %68, %68 : vector<1x32x256xf32>
    %cst_47 = arith.constant dense<0.000000e+00> : vector<1x32xf32>
    %70 = vector.multi_reduction <add>, %69, %cst_47 [2] : vector<1x32x256xf32> to vector<1x32xf32>
    %71 = vector.shape_cast %70 : vector<1x32xf32> to vector<1x32x1xf32>
    %cst_48 = arith.constant dense<0.000000e+00> : vector<1x1xf32>
    %72 = vector.multi_reduction <add>, %71, %cst_48 [1] : vector<1x32x1xf32> to vector<1x1xf32>
    %73 = vector.shape_cast %72 : vector<1x1xf32> to vector<1x1x1xf32>
    %74 = arith.addf %65, %73 : vector<1x1x1xf32>
    %cst_49 = arith.constant 3.05175781E-5 : f32
    %75 = vector.broadcast %cst_49 : f32 to vector<1x1x1xf32>
    %76 = arith.mulf %74, %75 : vector<1x1x1xf32>
    %cst_50 = arith.constant 9.99999974E-6 : f32
    %77 = vector.broadcast %cst_50 : f32 to vector<1x1x1xf32>
    %78 = arith.addf %76, %77 : vector<1x1x1xf32>
    %79 = math.rsqrt %78 : vector<1x1x1xf32>
    %c0_51 = arith.constant 0 : index
    %c0_52 = arith.constant 0 : index
    %c0_53 = arith.constant 0 : index
    %80 = vector.load %arg7[%c0_51, %c0_52, %c0_53] : memref<1x128x256xf32, #tpu.memory_space<vmem>>, vector<1x32x256xf32>
    %81 = vector.broadcast %37 : vector<1x1x1xf32> to vector<1x32x256xf32>
    %82 = arith.subf %80, %81 : vector<1x32x256xf32>
    %c0_54 = arith.constant 0 : index
    %c0_55 = arith.constant 0 : index
    %83 = vector.load %arg4[%c0_54, %c0_55] : memref<128x256xf32, #tpu.memory_space<vmem>>, vector<32x256xf32>
    %84 = vector.shape_cast %83 : vector<32x256xf32> to vector<1x32x256xf32>
    %c0_56 = arith.constant 0 : index
    %c0_57 = arith.constant 0 : index
    %85 = vector.load %arg5[%c0_56, %c0_57] : memref<128x256xf32, #tpu.memory_space<vmem>>, vector<32x256xf32>
    %86 = vector.shape_cast %85 : vector<32x256xf32> to vector<1x32x256xf32>
    %87 = vector.broadcast %79 : vector<1x1x1xf32> to vector<1x32x256xf32>
    %88 = arith.mulf %82, %87 : vector<1x32x256xf32>
    %89 = arith.mulf %88, %84 : vector<1x32x256xf32>
    %90 = arith.addf %89, %86 : vector<1x32x256xf32>
    %91 = arith.truncf %90 : vector<1x32x256xf32> to vector<1x32x256xbf16>
    %c0_58 = arith.constant 0 : index
    %c0_59 = arith.constant 0 : index
    %c0_60 = arith.constant 0 : index
    %92 = vector.load %arg6[%c0_58, %c0_59, %c0_60] : memref<1x128x256xbf16, #tpu.memory_space<vmem>>, vector<1x32x256xbf16>
    tpu.vector_store %arg6[%c0_58, %c0_59, %c0_60], %91 {strides = array<i32>} : memref<1x128x256xbf16, #tpu.memory_space<vmem>>, vector<1x32x256xbf16>,
    %c0_61 = arith.constant 0 : index
    %c32_62 = arith.constant 32 : index
    %c0_63 = arith.constant 0 : index
    %93 = vector.load %arg7[%c0_61, %c32_62, %c0_63] : memref<1x128x256xf32, #tpu.memory_space<vmem>>, vector<1x32x256xf32>
    %94 = vector.broadcast %37 : vector<1x1x1xf32> to vector<1x32x256xf32>
    %95 = arith.subf %93, %94 : vector<1x32x256xf32>
    %c32_64 = arith.constant 32 : index
    %c0_65 = arith.constant 0 : index
    %96 = vector.load %arg4[%c32_64, %c0_65] : memref<128x256xf32, #tpu.memory_space<vmem>>, vector<32x256xf32>
    %97 = vector.shape_cast %96 : vector<32x256xf32> to vector<1x32x256xf32>
    %c32_66 = arith.constant 32 : index
    %c0_67 = arith.constant 0 : index
    %98 = vector.load %arg5[%c32_66, %c0_67] : memref<128x256xf32, #tpu.memory_space<vmem>>, vector<32x256xf32>
    %99 = vector.shape_cast %98 : vector<32x256xf32> to vector<1x32x256xf32>
    %100 = vector.broadcast %79 : vector<1x1x1xf32> to vector<1x32x256xf32>
    %101 = arith.mulf %95, %100 : vector<1x32x256xf32>
    %102 = arith.mulf %101, %97 : vector<1x32x256xf32>
    %103 = arith.addf %102, %99 : vector<1x32x256xf32>
    %104 = arith.truncf %103 : vector<1x32x256xf32> to vector<1x32x256xbf16>
    %c0_68 = arith.constant 0 : index
    %c32_69 = arith.constant 32 : index
    %c0_70 = arith.constant 0 : index
    %105 = vector.load %arg6[%c0_68, %c32_69, %c0_70] : memref<1x128x256xbf16, #tpu.memory_space<vmem>>, vector<1x32x256xbf16>
    tpu.vector_store %arg6[%c0_68, %c32_69, %c0_70], %104 {strides = array<i32>} : memref<1x128x256xbf16, #tpu.memory_space<vmem>>, vector<1x32x256xbf16>,
    %c0_71 = arith.constant 0 : index
    %c64_72 = arith.constant 64 : index
    %c0_73 = arith.constant 0 : index
    %106 = vector.load %arg7[%c0_71, %c64_72, %c0_73] : memref<1x128x256xf32, #tpu.memory_space<vmem>>, vector<1x32x256xf32>
    %107 = vector.broadcast %37 : vector<1x1x1xf32> to vector<1x32x256xf32>
    %108 = arith.subf %106, %107 : vector<1x32x256xf32>
    %c64_74 = arith.constant 64 : index
    %c0_75 = arith.constant 0 : index
    %109 = vector.load %arg4[%c64_74, %c0_75] : memref<128x256xf32, #tpu.memory_space<vmem>>, vector<32x256xf32>
    %110 = vector.shape_cast %109 : vector<32x256xf32> to vector<1x32x256xf32>
    %c64_76 = arith.constant 64 : index
    %c0_77 = arith.constant 0 : index
    %111 = vector.load %arg5[%c64_76, %c0_77] : memref<128x256xf32, #tpu.memory_space<vmem>>, vector<32x256xf32>
    %112 = vector.shape_cast %111 : vector<32x256xf32> to vector<1x32x256xf32>
    %113 = vector.broadcast %79 : vector<1x1x1xf32> to vector<1x32x256xf32>
    %114 = arith.mulf %108, %113 : vector<1x32x256xf32>
    %115 = arith.mulf %114, %110 : vector<1x32x256xf32>
    %116 = arith.addf %115, %112 : vector<1x32x256xf32>
    %117 = arith.truncf %116 : vector<1x32x256xf32> to vector<1x32x256xbf16>
    %c0_78 = arith.constant 0 : index
    %c64_79 = arith.constant 64 : index
    %c0_80 = arith.constant 0 : index
    %118 = vector.load %arg6[%c0_78, %c64_79, %c0_80] : memref<1x128x256xbf16, #tpu.memory_space<vmem>>, vector<1x32x256xbf16>
    tpu.vector_store %arg6[%c0_78, %c64_79, %c0_80], %117 {strides = array<i32>} : memref<1x128x256xbf16, #tpu.memory_space<vmem>>, vector<1x32x256xbf16>,
    %c0_81 = arith.constant 0 : index
    %c96_82 = arith.constant 96 : index
    %c0_83 = arith.constant 0 : index
    %119 = vector.load %arg7[%c0_81, %c96_82, %c0_83] : memref<1x128x256xf32, #tpu.memory_space<vmem>>, vector<1x32x256xf32>
    %120 = vector.broadcast %37 : vector<1x1x1xf32> to vector<1x32x256xf32>
    %121 = arith.subf %119, %120 : vector<1x32x256xf32>
    %c96_84 = arith.constant 96 : index
    %c0_85 = arith.constant 0 : index
    %122 = vector.load %arg4[%c96_84, %c0_85] : memref<128x256xf32, #tpu.memory_space<vmem>>, vector<32x256xf32>
    %123 = vector.shape_cast %122 : vector<32x256xf32> to vector<1x32x256xf32>
    %c96_86 = arith.constant 96 : index
    %c0_87 = arith.constant 0 : index
    %124 = vector.load %arg5[%c96_86, %c0_87] : memref<128x256xf32, #tpu.memory_space<vmem>>, vector<32x256xf32>
    %125 = vector.shape_cast %124 : vector<32x256xf32> to vector<1x32x256xf32>
    %126 = vector.broadcast %79 : vector<1x1x1xf32> to vector<1x32x256xf32>
    %127 = arith.mulf %121, %126 : vector<1x32x256xf32>
    %128 = arith.mulf %127, %123 : vector<1x32x256xf32>
    %129 = arith.addf %128, %125 : vector<1x32x256xf32>
    %130 = arith.truncf %129 : vector<1x32x256xf32> to vector<1x32x256xbf16>
    %c0_88 = arith.constant 0 : index
    %c96_89 = arith.constant 96 : index
    %c0_90 = arith.constant 0 : index
    %131 = vector.load %arg6[%c0_88, %c96_89, %c0_90] : memref<1x128x256xbf16, #tpu.memory_space<vmem>>, vector<1x32x256xbf16>
    tpu.vector_store %arg6[%c0_88, %c96_89, %c0_90], %130 {strides = array<i32>} : memref<1x128x256xbf16, #tpu.memory_space<vmem>>, vector<1x32x256xbf16>,
    return
  }
  func.func @transform_0(%arg0: i32) -> (i32, i32, i32) {
    %c0_i32 = arith.constant 0 : i32
    %c0_i32_0 = arith.constant 0 : i32
    %c0_i32_1 = arith.constant 0 : i32
    return %arg0, %c0_i32, %c0_i32_0 : i32, i32, i32
  }
  func.func @transform_1(%arg0: i32) -> (i32, i32) {
    %c0_i32 = arith.constant 0 : i32
    %c0_i32_0 = arith.constant 0 : i32
    %c0_i32_1 = arith.constant 0 : i32
    return %c0_i32, %c0_i32_0 : i32, i32
  }
  func.func @transform_2(%arg0: i32) -> (i32, i32) {
    %c0_i32 = arith.constant 0 : i32
    %c0_i32_0 = arith.constant 0 : i32
    %c0_i32_1 = arith.constant 0 : i32
    return %c0_i32, %c0_i32_0 : i32, i32
  }
  func.func @transform_3(%arg0: i32) -> (i32, i32) {
    %c0_i32 = arith.constant 0 : i32
    %c0_i32_0 = arith.constant 0 : i32
    %c0_i32_1 = arith.constant 0 : i32
    return %c0_i32, %c0_i32_0 : i32, i32
  }
  func.func @transform_4(%arg0: i32) -> (i32, i32) {
    %c0_i32 = arith.constant 0 : i32
    %c0_i32_0 = arith.constant 0 : i32
    %c0_i32_1 = arith.constant 0 : i32
    return %c0_i32, %c0_i32_0 : i32, i32
  }
  func.func @transform_5(%arg0: i32) -> (i32, i32, i32) {
    %c0_i32 = arith.constant 0 : i32
    %c0_i32_0 = arith.constant 0 : i32
    %c0_i32_1 = arith.constant 0 : i32
    return %arg0, %c0_i32, %c0_i32_0 : i32, i32, i32
  }
}

</mosaic_0001>

<llo_original>
// kernel: primary_capsules_forward.1
$region0: #{primary_capsules_forward.1}
  #allocation0 [shape = 'u32[]', space=smem, size = 0x4, offset = 0x4, fixed_abs, tag = 'smem constant byte address 0x4 - core index']
  #allocation1 [shape = 'u32[144,128]{1,0:T(1,128)}', space=vmem, size = 0x12000, scoped, tag = 'internal scratch']
  #allocation2 [shape = 'f32[1,128,256]{2,1,0:T(8,128)}', space=vmem, size = 0x20000, scoped, tag = 'scratch operand']
  %s0 = inlined_call_operand.vmem [shape: f32[2,128,256], index: 0, kind: input, shape index: {}]
  %s1 = inlined_call_operand.vmem [shape: bf16[128,128], index: 1, kind: input, shape index: {}]
  %s2 = inlined_call_operand.vmem [shape: f32[128,1], index: 2, kind: input, shape index: {}]
  %s3 = inlined_call_operand.vmem [shape: f32[128,256], index: 3, kind: input, shape index: {}]
  %s4 = inlined_call_operand.vmem [shape: f32[128,256], index: 4, kind: input, shape index: {}]
  %s5 = inlined_call_operand.vmem [shape: bf16[2,128,256], index: 5, kind: output, shape index: {}]
  %s6 = sld [smem:[#allocation0]]
  $region53: #{primary_capsules_forward.1} parent=0
    _
  %s8 = ssub.s32 1, %s6
  %s9 = scalar_select 0, %s8, %s6
  loop: start=0, step=1, limit=4
  $region2: #{primary_capsules_forward.1} parent=0 // loop_pre_header
    _
  $region3: #{primary_capsules_forward.1} parent=0 // loop_header
    %s11 = sphi 0, %s15
    %p12 = scmp.ge.s32.totalorder %s11, 4
    %s21 = sphi 0, %s23
    %s24 = sphi 0, %s21
    %s25 = sphi 0, %s24
    %s41 = sphi 0, %s25
    %s45 = sphi 0, %s45
    %s47 = sphi 0, %s45
    %s48 = sphi 0, %s47
    %s62 = sphi 0, %s48
    %s66 = sphi 0, %s66
    %s68 = sphi 0, %s66
    %s69 = sphi 0, %s68
    %s83 = sphi 0, %s69
    %s87 = sphi 0, %s87
    %s89 = sphi 0, %s87
    %s90 = sphi 0, %s89
    %s104 = sphi 0, %s90
    %s108 = sphi 0, %s108
    %s110 = sphi 0, %s108
    %s111 = sphi 0, %s110
    %s125 = sphi 0, %s111
    %s131 = sphi 0, %s133
    %s134 = sphi 0, %s131
    %s135 = sphi 0, %s134
    %s151 = sphi 0, %s135
  $region4: #{primary_capsules_forward.1} parent=0 // loop_header_branch
    %14 = sbr.rel (%p12) target = $region8
  $region5: #{primary_capsules_forward.1} parent=0 // loop_body
    %s16 = ssub.s32 %s11, 1
    %s17 = ssub.s32 %s11, 2
    %s18 = sadd.s32 %s11, 1
    %s19 = ssub.s32 %s11, %s18
    %p20 = scmp.eq.s32.totalorder %s19, 0
    %s22 = sadd.s32 %s21, 1
    %s23 = scalar_select %p20, %s21, %s22
    %p26 = pneg %p20
    %p27 = scmp.eq.s32.totalorder %s11, 1
    %p28 = por %p26, %p27
    %p29 = scmp.ne.s32.totalorder %s21, %s24
    %p30 = scmp.eq.s32.totalorder %s11, 0
    %p31 = por %p29, %p30
    %p32 = scmp.ne.s32.totalorder %s21, %s24
    %p33 = scmp.eq.s32.totalorder %s16, 1
    %p34 = por %p32, %p33
    %p35 = scmp.ne.s32.totalorder %s24, %s25
    %p36 = scmp.eq.s32.totalorder %s16, 0
    %p37 = por %p35, %p36
    %p38 = scmp.ne.s32.totalorder %s24, %s25
    %p39 = scmp.eq.s32.totalorder %s17, 1
    %p40 = por %p38, %p39
    %p42 = scmp.ne.s32.totalorder %s25, %s41
    %p43 = scmp.eq.s32.totalorder %s17, 0
    %p44 = por %p42, %p43
    %s46 = sadd.s32 %s45, 1
    %p49 = scmp.eq.s32.totalorder %s11, 1
    %p50 = scmp.ne.s32.totalorder %s45, %s47
    %p51 = scmp.eq.s32.totalorder %s11, 0
    %p52 = por %p50, %p51
    %p53 = scmp.ne.s32.totalorder %s45, %s47
    %p54 = scmp.eq.s32.totalorder %s16, 1
    %p55 = por %p53, %p54
    %p56 = scmp.ne.s32.totalorder %s47, %s48
    %p57 = scmp.eq.s32.totalorder %s16, 0
    %p58 = por %p56, %p57
    %p59 = scmp.ne.s32.totalorder %s47, %s48
    %p60 = scmp.eq.s32.totalorder %s17, 1
    %p61 = por %p59, %p60
    %p63 = scmp.ne.s32.totalorder %s48, %s62
    %p64 = scmp.eq.s32.totalorder %s17, 0
    %p65 = por %p63, %p64
    %s67 = sadd.s32 %s66, 1
    %p70 = scmp.eq.s32.totalorder %s11, 1
    %p71 = scmp.ne.s32.totalorder %s66, %s68
    %p72 = scmp.eq.s32.totalorder %s11, 0
    %p73 = por %p71, %p72
    %p74 = scmp.ne.s32.totalorder %s66, %s68
    %p75 = scmp.eq.s32.totalorder %s16, 1
    %p76 = por %p74, %p75
    %p77 = scmp.ne.s32.totalorder %s68, %s69
    %p78 = scmp.eq.s32.totalorder %s16, 0
    %p79 = por %p77, %p78
    %p80 = scmp.ne.s32.totalorder %s68, %s69
    %p81 = scmp.eq.s32.totalorder %s17, 1
    %p82 = por %p80, %p81
    %p84 = scmp.ne.s32.totalorder %s69, %s83
    %p85 = scmp.eq.s32.totalorder %s17, 0
    %p86 = por %p84, %p85
    %s88 = sadd.s32 %s87, 1
    %p91 = scmp.eq.s32.totalorder %s11, 1
    %p92 = scmp.ne.s32.totalorder %s87, %s89
    %p93 = scmp.eq.s32.totalorder %s11, 0
    %p94 = por %p92, %p93
    %p95 = scmp.ne.s32.totalorder %s87, %s89
    %p96 = scmp.eq.s32.totalorder %s16, 1
    %p97 = por %p95, %p96
    %p98 = scmp.ne.s32.totalorder %s89, %s90
    %p99 = scmp.eq.s32.totalorder %s16, 0
    %p100 = por %p98, %p99
    %p101 = scmp.ne.s32.totalorder %s89, %s90
    %p102 = scmp.eq.s32.totalorder %s17, 1
    %p103 = por %p101, %p102
    %p105 = scmp.ne.s32.totalorder %s90, %s104
    %p106 = scmp.eq.s32.totalorder %s17, 0
    %p107 = por %p105, %p106
    %s109 = sadd.s32 %s108, 1
    %p112 = scmp.eq.s32.totalorder %s11, 1
    %p113 = scmp.ne.s32.totalorder %s108, %s110
    %p114 = scmp.eq.s32.totalorder %s11, 0
    %p115 = por %p113, %p114
    %p116 = scmp.ne.s32.totalorder %s108, %s110
    %p117 = scmp.eq.s32.totalorder %s16, 1
    %p118 = por %p116, %p117
    %p119 = scmp.ne.s32.totalorder %s110, %s111
    %p120 = scmp.eq.s32.totalorder %s16, 0
    %p121 = por %p119, %p120
    %p122 = scmp.ne.s32.totalorder %s110, %s111
    %p123 = scmp.eq.s32.totalorder %s17, 1
    %p124 = por %p122, %p123
    %p126 = scmp.ne.s32.totalorder %s111, %s125
    %p127 = scmp.eq.s32.totalorder %s17, 0
    %p128 = por %p126, %p127
    %s129 = ssub.s32 %s11, %s18
    %p130 = scmp.eq.s32.totalorder %s129, 0
    %s132 = sadd.s32 %s131, 1
    %s133 = scalar_select %p130, %s131, %s132
    %p136 = pneg %p130
    %p137 = scmp.eq.s32.totalorder %s11, 1
    %p138 = por %p136, %p137
    %p139 = scmp.ne.s32.totalorder %s131, %s134
    %p140 = scmp.eq.s32.totalorder %s11, 0
    %p141 = por %p139, %p140
    %p142 = scmp.ne.s32.totalorder %s131, %s134
    %p143 = scmp.eq.s32.totalorder %s16, 1
    %p144 = por %p142, %p143
    %p145 = scmp.ne.s32.totalorder %s134, %s135
    %p146 = scmp.eq.s32.totalorder %s16, 0
    %p147 = por %p145, %p146
    %p148 = scmp.ne.s32.totalorder %s134, %s135
    %p149 = scmp.eq.s32.totalorder %s17, 1
    %p150 = por %p148, %p149
    %p152 = scmp.ne.s32.totalorder %s135, %s151
    %p153 = scmp.eq.s32.totalorder %s17, 0
    %p154 = por %p152, %p153
    %p155 = scmp.le.s32.totalorder 1, %s11
    %p156 = scmp.lt.s32.totalorder %s11, 3
    %p157 = pnand %p155, %p156
    %p158 = pneg %p157
    // Predicated region
    $region9: #{primary_capsules_forward.1} parent=5 // pred_check
      _
    $region10: #{primary_capsules_forward.1} parent=5 // pred_check_branch
      %160 = sbr.rel (%p157) target = $region12
    $region11: #{primary_capsules_forward.1} parent=5 // pred_region
      %s161 = ssub.s32 %s11, 1
      // Predicated region
      $region13: #{primary_capsules_forward.1} parent=11 // pred_check
        %p162 = pneg %p58
      $region14: #{primary_capsules_forward.1} parent=11 // pred_check_branch
        %164 = sbr.rel (%p162) target = $region16
      $region15: #{primary_capsules_forward.1} parent=11 // pred_region
        _
      $region16: #{primary_capsules_forward.1} parent=11 // pred_fallthru
        _
      // Predicated region
      $region17: #{primary_capsules_forward.1} parent=11 // pred_check
        %p165 = pneg %p79
      $region18: #{primary_capsules_forward.1} parent=11 // pred_check_branch
        %167 = sbr.rel (%p165) target = $region20
      $region19: #{primary_capsules_forward.1} parent=11 // pred_region
        _
      $region20: #{primary_capsules_forward.1} parent=11 // pred_fallthru
        _
      // Predicated region
      $region21: #{primary_capsules_forward.1} parent=11 // pred_check
        %p168 = pneg %p100
      $region22: #{primary_capsules_forward.1} parent=11 // pred_check_branch
        %170 = sbr.rel (%p168) target = $region24
      $region23: #{primary_capsules_forward.1} parent=11 // pred_region
        _
      $region24: #{primary_capsules_forward.1} parent=11 // pred_fallthru
        _
      // Predicated region
      $region25: #{primary_capsules_forward.1} parent=11 // pred_check
        %p171 = pneg %p121
      $region26: #{primary_capsules_forward.1} parent=11 // pred_check_branch
        %173 = sbr.rel (%p171) target = $region28
      $region27: #{primary_capsules_forward.1} parent=11 // pred_region
        _
      $region28: #{primary_capsules_forward.1} parent=11 // pred_fallthru
        _
    $region12: #{primary_capsules_forward.1} parent=5 // pred_fallthru
      _
    %p174 = scmp.lt.s32.totalorder %s11, 2
    // Predicated region
    $region29: #{primary_capsules_forward.1} parent=5 // pred_check
      %p175 = pneg %p174
    $region30: #{primary_capsules_forward.1} parent=5 // pred_check_branch
      %177 = sbr.rel (%p175) target = $region32
    $region31: #{primary_capsules_forward.1} parent=5 // pred_region
      // Predicated region
      $region33: #{primary_capsules_forward.1} parent=31 // pred_check
        %p178 = pneg %p31
      $region34: #{primary_capsules_forward.1} parent=31 // pred_check_branch
        %180 = sbr.rel (%p178) target = $region36
      $region35: #{primary_capsules_forward.1} parent=31 // pred_region
        %p181 = scmp.lt.s32.totalorder %s11, 1
        %s182 = scalar_select %p181, %s11, 1
        %s183 = smul.addr %s182, 32
        %s184 = smul.addr %s183, 8
        %s185 = scalar_lea.vmem %s0, %s184
      $region36: #{primary_capsules_forward.1} parent=31 // pred_fallthru
        _
    $region32: #{primary_capsules_forward.1} parent=5 // pred_fallthru
      _
    %p186 = scmp.le.s32.totalorder 1, %s11
    %p187 = scmp.lt.s32.totalorder %s11, 3
    %p188 = pnand %p186, %p187
    %p189 = pneg %p188
    // Predicated region
    $region37: #{primary_capsules_forward.1} parent=5 // pred_check
      _
    $region38: #{primary_capsules_forward.1} parent=5 // pred_check_branch
      %191 = sbr.rel (%p188) target = $region40
    $region39: #{primary_capsules_forward.1} parent=5 // pred_region
      %s192 = ssub.s32 %s11, 1
      %p193 = scmp.lt.s32.totalorder %s16, 1
      %s194 = scalar_select %p193, %s16, 1
      %s195 = smul.addr %s194, 32
      %s196 = smul.addr %s195, 8
      %s197 = scalar_lea.vmem %s0, %s196
      %p198 = pneg %p37
      %p199 = pneg %p34
      %p200 = pneg %p58
      %p201 = pneg %p55
      %p202 = pneg %p79
      %p203 = pneg %p76
      %p204 = pneg %p100
      %p205 = pneg %p97
      %p206 = pneg %p121
      %p207 = pneg %p118
      %p208 = pneg %p147
      %p209 = pneg %p144
      %p210 = scmp.lt.s32.totalorder %s16, 1
      %s211 = scalar_select %p210, %s16, 1
      %s212 = smul.addr %s211, 32
      %s213 = smul.addr %s212, 4
      %s214 = scalar_lea.vmem %s5, %s213
      %p215 = scmp.lt.s32.totalorder %s16, 1
      %s216 = scalar_select %p215, %s16, 1
      %s217 = smul.addr %s216, 32
      %s218 = smul.addr %s217, 8
      %s219 = scalar_lea.vmem %s0, %s218
      %p220 = scmp.lt.s32.totalorder %s16, 1
      %s221 = scalar_select %p220, %s16, 1
      %s222 = smul.addr %s221, 32
      %s223 = smul.addr %s222, 4
      %s224 = scalar_lea.vmem %s5, %s223
      %v226 = vld [vmem:[%s219] sm:$0xff]
      %v227 = vld [vmem:[%s219 + $0x8] sm:$0xff]
      %v228 = vld [vmem:[%s219 + $0x10] sm:$0xff]
      %v229 = vld [vmem:[%s219 + $0x18] sm:$0xff]
      %v230 = vld [vmem:[%s219 + $0x20] sm:$0xff]
      %v231 = vld [vmem:[%s219 + $0x28] sm:$0xff]
      %v232 = vld [vmem:[%s219 + $0x30] sm:$0xff]
      %v233 = vld [vmem:[%s219 + $0x38] sm:$0xff]
      %v234 = vld [vmem:[%s219 + $0x40] sm:$0xff]
      %v235 = vld [vmem:[%s219 + $0x48] sm:$0xff]
      %v236 = vld [vmem:[%s219 + $0x50] sm:$0xff]
      %v237 = vld [vmem:[%s219 + $0x58] sm:$0xff]
      %v238 = vld [vmem:[%s219 + $0x60] sm:$0xff]
      %v239 = vld [vmem:[%s219 + $0x68] sm:$0xff]
      %v240 = vld [vmem:[%s219 + $0x70] sm:$0xff]
      %v241 = vld [vmem:[%s219 + $0x78] sm:$0xff]
      %v242 = vld [vmem:[%s219 + $0x80] sm:$0xff]
      %v243 = vld [vmem:[%s219 + $0x88] sm:$0xff]
      %v244 = vld [vmem:[%s219 + $0x90] sm:$0xff]
      %v245 = vld [vmem:[%s219 + $0x98] sm:$0xff]
      %v246 = vld [vmem:[%s219 + $0xa0] sm:$0xff]
      %v247 = vld [vmem:[%s219 + $0xa8] sm:$0xff]
      %v248 = vld [vmem:[%s219 + $0xb0] sm:$0xff]
      %v249 = vld [vmem:[%s219 + $0xb8] sm:$0xff]
      %v250 = vld [vmem:[%s219 + $0xc0] sm:$0xff]
      %v251 = vld [vmem:[%s219 + $0xc8] sm:$0xff]
      %v252 = vld [vmem:[%s219 + $0xd0] sm:$0xff]
      %v253 = vld [vmem:[%s219 + $0xd8] sm:$0xff]
      %v254 = vld [vmem:[%s219 + $0xe0] sm:$0xff]
      %v255 = vld [vmem:[%s219 + $0xe8] sm:$0xff]
      %v256 = vld [vmem:[%s219 + $0xf0] sm:$0xff]
      %v257 = vld [vmem:[%s219 + $0xf8] sm:$0xff]
      %v258 = vpack.c.bf16 %v228, %v226
      %v259 = vpack.c.bf16 %v229, %v227
      %v260 = vpack.c.bf16 %v232, %v230
      %v261 = vpack.c.bf16 %v233, %v231
      %v262 = vpack.c.bf16 %v236, %v234
      %v263 = vpack.c.bf16 %v237, %v235
      %v264 = vpack.c.bf16 %v240, %v238
      %v265 = vpack.c.bf16 %v241, %v239
      %v266 = vpack.c.bf16 %v244, %v242
      %v267 = vpack.c.bf16 %v245, %v243
      %v268 = vpack.c.bf16 %v248, %v246
      %v269 = vpack.c.bf16 %v249, %v247
      %v270 = vpack.c.bf16 %v252, %v250
      %v271 = vpack.c.bf16 %v253, %v251
      %v272 = vpack.c.bf16 %v256, %v254
      %v273 = vpack.c.bf16 %v257, %v255
      %v274 = vld [vmem:[%s1] sm:$0xf]
      %v275 = vld [vmem:[%s1 + $0x4] sm:$0xf]
      %v276 = vld [vmem:[%s1 + $0x8] sm:$0xf]
      %v277 = vld [vmem:[%s1 + $0xc] sm:$0xf]
      %v278 = vld [vmem:[%s1 + $0x10] sm:$0xf]
      %v279 = vld [vmem:[%s1 + $0x14] sm:$0xf]
      %v280 = vld [vmem:[%s1 + $0x18] sm:$0xf]
      %v281 = vld [vmem:[%s1 + $0x1c] sm:$0xf]
      %v282 = vld [vmem:[%s1 + $0x20] sm:$0xf]
      %v283 = vld [vmem:[%s1 + $0x24] sm:$0xf]
      %v284 = vld [vmem:[%s1 + $0x28] sm:$0xf]
      %v285 = vld [vmem:[%s1 + $0x2c] sm:$0xf]
      %v286 = vld [vmem:[%s1 + $0x30] sm:$0xf]
      %v287 = vld [vmem:[%s1 + $0x34] sm:$0xf]
      %v288 = vld [vmem:[%s1 + $0x38] sm:$0xf]
      %v289 = vld [vmem:[%s1 + $0x3c] sm:$0xf]
      %v290 = vld [vmem:[%s2] sm:$0xff]
      %v291 = vld [vmem:[%s2 + $0x8] sm:$0xff]
      %v292 = vld [vmem:[%s2 + $0x10] sm:$0xff]
      %v293 = vld [vmem:[%s2 + $0x18] sm:$0xff]
      %v294 = vld [vmem:[%s2 + $0x20] sm:$0xff]
      %v295 = vld [vmem:[%s2 + $0x28] sm:$0xff]
      %v296 = vld [vmem:[%s2 + $0x30] sm:$0xff]
      %v297 = vld [vmem:[%s2 + $0x38] sm:$0xff]
      %v298 = vld [vmem:[%s2 + $0x40] sm:$0xff]
      %v299 = vld [vmem:[%s2 + $0x48] sm:$0xff]
      %v300 = vld [vmem:[%s2 + $0x50] sm:$0xff]
      %v301 = vld [vmem:[%s2 + $0x58] sm:$0xff]
      %v302 = vld [vmem:[%s2 + $0x60] sm:$0xff]
      %v303 = vld [vmem:[%s2 + $0x68] sm:$0xff]
      %v304 = vld [vmem:[%s2 + $0x70] sm:$0xff]
      %v305 = vld [vmem:[%s2 + $0x78] sm:$0xff]
      %307 = vset.pattern.permute.xlu0 0
      %308 = vperm.xlu0 %307, %v290
      %v309 = vpop.permute.xlu0 %308
      %312 = vset.pattern.permute.xlu0 0
      %313 = vperm.xlu0 %312, %v291
      %v314 = vpop.permute.xlu0 %313
      %317 = vset.pattern.permute.xlu0 0
      %318 = vperm.xlu0 %317, %v292
      %v319 = vpop.permute.xlu0 %318
      %322 = vset.pattern.permute.xlu0 0
      %323 = vperm.xlu0 %322, %v293
      %v324 = vpop.permute.xlu0 %323
      %327 = vset.pattern.permute.xlu0 0
      %328 = vperm.xlu0 %327, %v294
      %v329 = vpop.permute.xlu0 %328
      %332 = vset.pattern.permute.xlu0 0
      %333 = vperm.xlu0 %332, %v295
      %v334 = vpop.permute.xlu0 %333
      %337 = vset.pattern.permute.xlu0 0
      %338 = vperm.xlu0 %337, %v296
      %v339 = vpop.permute.xlu0 %338
      %342 = vset.pattern.permute.xlu0 0
      %343 = vperm.xlu0 %342, %v297
      %v344 = vpop.permute.xlu0 %343
      %347 = vset.pattern.permute.xlu0 0
      %348 = vperm.xlu0 %347, %v298
      %v349 = vpop.permute.xlu0 %348
      %352 = vset.pattern.permute.xlu0 0
      %353 = vperm.xlu0 %352, %v299
      %v354 = vpop.permute.xlu0 %353
      %357 = vset.pattern.permute.xlu0 0
      %358 = vperm.xlu0 %357, %v300
      %v359 = vpop.permute.xlu0 %358
      %362 = vset.pattern.permute.xlu0 0
      %363 = vperm.xlu0 %362, %v301
      %v364 = vpop.permute.xlu0 %363
      %367 = vset.pattern.permute.xlu0 0
      %368 = vperm.xlu0 %367, %v302
      %v369 = vpop.permute.xlu0 %368
      %372 = vset.pattern.permute.xlu0 0
      %373 = vperm.xlu0 %372, %v303
      %v374 = vpop.permute.xlu0 %373
      %377 = vset.pattern.permute.xlu0 0
      %378 = vperm.xlu0 %377, %v304
      %v379 = vpop.permute.xlu0 %378
      %382 = vset.pattern.permute.xlu0 0
      %383 = vperm.xlu0 %382, %v305
      %v384 = vpop.permute.xlu0 %383
      %v402 = vunpack.c.l.b16 %v274
      %v403 = vunpack.c.l.b16 %v275
      %v404 = vunpack.c.l.b16 %v276
      %v405 = vunpack.c.l.b16 %v277
      %v406 = vunpack.c.l.b16 %v278
      %v407 = vunpack.c.l.b16 %v279
      %v408 = vunpack.c.l.b16 %v280
      %v409 = vunpack.c.l.b16 %v281
      %v410 = vunpack.c.l.b16 %v282
      %v411 = vunpack.c.l.b16 %v283
      %v412 = vunpack.c.l.b16 %v284
      %v413 = vunpack.c.l.b16 %v285
      %v414 = vunpack.c.l.b16 %v286
      %v415 = vunpack.c.l.b16 %v287
      %v416 = vunpack.c.l.b16 %v288
      %v417 = vunpack.c.l.b16 %v289
      %v418 = vpack.c.b16 %v403, %v402
      %v419 = vpack.c.b16 %v405, %v404
      %v420 = vpack.c.b16 %v407, %v406
      %v421 = vpack.c.b16 %v409, %v408
      %v422 = vpack.c.b16 %v411, %v410
      %v423 = vpack.c.b16 %v413, %v412
      %v424 = vpack.c.b16 %v415, %v414
      %v425 = vpack.c.b16 %v417, %v416
      %434 = vmatprep.subr.bf16.mxu0 %v273
      %435 = vmatpush1.bf16.msra.mxu0 %v272
      %436 = vmatprep.subr.bf16.mxu0 %v271
      %437 = vmatpush1.bf16.msra.mxu0 %v270
      %438 = vmatprep.subr.bf16.mxu0 %v269
      %439 = vmatpush1.bf16.msra.mxu0 %v268
      %440 = vmatprep.subr.bf16.mxu0 %v267
      %441 = vmatpush1.bf16.msra.mxu0 %v266
      %442 = vmatprep.subr.bf16.mxu0 %v265
      %443 = vmatpush1.bf16.msra.mxu0 %v264
      %444 = vmatprep.subr.bf16.mxu0 %v263
      %445 = vmatpush1.bf16.msra.mxu0 %v262
      %446 = vmatprep.subr.bf16.mxu0 %v261
      %447 = vmatpush1.bf16.msra.mxu0 %v260
      %448 = vmatprep.subr.bf16.mxu0 %v259
      %449 = vmatpush1.bf16.msra.mxu0 %v258
      %450 = vmatprep.subr.bf16.mxu0 0
      %451 = vmatpush2.bf16.msra.mxu0 0
      %452 = vmatprep.subr.bf16.mxu0 0
      %453 = vmatpush2.bf16.msra.mxu0 0
      %454 = vmatprep.subr.bf16.mxu0 0
      %455 = vmatpush2.bf16.msra.mxu0 0
      %456 = vmatprep.subr.bf16.mxu0 0
      %457 = vmatpush2.bf16.msra.mxu0 0
      %458 = vmatprep.subr.bf16.mxu0 0
      %459 = vmatpush2.bf16.msra.mxu0 0
      %460 = vmatprep.subr.bf16.mxu0 0
      %461 = vmatpush2.bf16.msra.mxu0 0
      %462 = vmatprep.subr.bf16.mxu0 0
      %463 = vmatpush2.bf16.msra.mxu0 0
      %464 = vmatprep.subr.bf16.mxu0 0
      %465 = vmatpush2.bf16.msra.mxu0 0
      %466 = vmatprep.mubr.bf16.mxu0 0
      %467 = vmatmul.mubr.bf16.gmra.mxu0 %v418
      %v468 = vpop.f32.mrf.mxu0
      %v469 = vadd.f32 %v309, %v468
      %v470 = vpop.f32.mrf.mxu0
      %v471 = vadd.f32 %v309, %v470
      %v472 = vpop.f32.mrf.mxu0
      %v473 = vadd.f32 %v314, %v472
      %v474 = vpop.f32.mrf.mxu0
      %v475 = vadd.f32 %v314, %v474
      %476 = vmatprep.mubr.bf16.mxu0 0
      %477 = vmatmul.mubr.bf16.gmra.mxu0 %v419
      %v478 = vpop.f32.mrf.mxu0
      %v479 = vadd.f32 %v319, %v478
      %v480 = vpop.f32.mrf.mxu0
      %v481 = vadd.f32 %v319, %v480
      %v482 = vpop.f32.mrf.mxu0
      %v483 = vadd.f32 %v324, %v482
      %v484 = vpop.f32.mrf.mxu0
      %v485 = vadd.f32 %v324, %v484
      %486 = vmatprep.mubr.bf16.mxu0 0
      %487 = vmatmul.mubr.bf16.gmra.mxu0 %v420
      %v488 = vpop.f32.mrf.mxu0
      %v489 = vadd.f32 %v329, %v488
      %v490 = vpop.f32.mrf.mxu0
      %v491 = vadd.f32 %v329, %v490
      %v492 = vpop.f32.mrf.mxu0
      %v493 = vadd.f32 %v334, %v492
      %v494 = vpop.f32.mrf.mxu0
      %v495 = vadd.f32 %v334, %v494
      %496 = vmatprep.mubr.bf16.mxu0 0
      %497 = vmatmul.mubr.bf16.gmra.mxu0 %v421
      %v498 = vpop.f32.mrf.mxu0
      %v499 = vadd.f32 %v339, %v498
      %v500 = vpop.f32.mrf.mxu0
      %v501 = vadd.f32 %v339, %v500
      %v502 = vpop.f32.mrf.mxu0
      %v503 = vadd.f32 %v344, %v502
      %v504 = vpop.f32.mrf.mxu0
      %v505 = vadd.f32 %v344, %v504
      %506 = vmatprep.mubr.bf16.mxu0 0
      %507 = vmatmul.mubr.bf16.gmra.mxu0 %v422
      %v508 = vpop.f32.mrf.mxu0
      %v509 = vadd.f32 %v349, %v508
      %v510 = vpop.f32.mrf.mxu0
      %v511 = vadd.f32 %v349, %v510
      %v512 = vpop.f32.mrf.mxu0
      %v513 = vadd.f32 %v354, %v512
      %v514 = vpop.f32.mrf.mxu0
      %v515 = vadd.f32 %v354, %v514
      %516 = vmatprep.mubr.bf16.mxu0 0
      %517 = vmatmul.mubr.bf16.gmra.mxu0 %v423
      %v518 = vpop.f32.mrf.mxu0
      %v519 = vadd.f32 %v359, %v518
      %v520 = vpop.f32.mrf.mxu0
      %v521 = vadd.f32 %v359, %v520
      %v522 = vpop.f32.mrf.mxu0
      %v523 = vadd.f32 %v364, %v522
      %v524 = vpop.f32.mrf.mxu0
      %v525 = vadd.f32 %v364, %v524
      %526 = vmatprep.mubr.bf16.mxu0 0
      %527 = vmatmul.mubr.bf16.gmra.mxu0 %v424
      %v528 = vpop.f32.mrf.mxu0
      %v529 = vadd.f32 %v369, %v528
      %v530 = vpop.f32.mrf.mxu0
      %v531 = vadd.f32 %v369, %v530
      %v532 = vpop.f32.mrf.mxu0
      %v533 = vadd.f32 %v374, %v532
      %v534 = vpop.f32.mrf.mxu0
      %v535 = vadd.f32 %v374, %v534
      %536 = vmatprep.mubr.bf16.mxu0 0
      %537 = vmatmul.mubr.bf16.gmra.mxu0 %v425
      %v538 = vpop.f32.mrf.mxu0
      %v539 = vadd.f32 %v379, %v538
      %v540 = vpop.f32.mrf.mxu0
      %v541 = vadd.f32 %v379, %v540
      %v542 = vpop.f32.mrf.mxu0
      %v543 = vadd.f32 %v384, %v542
      %v544 = vpop.f32.mrf.mxu0
      %v545 = vadd.f32 %v384, %v544
      %546 = vdwg.mxu0
      %547 = vst [vmem:[#allocation2] sm:$0xff] %v469
      %548 = vst [vmem:[#allocation2 + $0x8] sm:$0xff] %v471
      %549 = vst [vmem:[#allocation2 + $0x10] sm:$0xff] %v473
      %550 = vst [vmem:[#allocation2 + $0x18] sm:$0xff] %v475
      %551 = vst [vmem:[#allocation2 + $0x20] sm:$0xff] %v479
      %552 = vst [vmem:[#allocation2 + $0x28] sm:$0xff] %v481
      %553 = vst [vmem:[#allocation2 + $0x30] sm:$0xff] %v483
      %554 = vst [vmem:[#allocation2 + $0x38] sm:$0xff] %v485
      %555 = vst [vmem:[#allocation2 + $0x40] sm:$0xff] %v489
      %556 = vst [vmem:[#allocation2 + $0x48] sm:$0xff] %v491
      %557 = vst [vmem:[#allocation2 + $0x50] sm:$0xff] %v493
      %558 = vst [vmem:[#allocation2 + $0x58] sm:$0xff] %v495
      %559 = vst [vmem:[#allocation2 + $0x60] sm:$0xff] %v499
      %560 = vst [vmem:[#allocation2 + $0x68] sm:$0xff] %v501
      %561 = vst [vmem:[#allocation2 + $0x70] sm:$0xff] %v503
      %562 = vst [vmem:[#allocation2 + $0x78] sm:$0xff] %v505
      %563 = vst [vmem:[#allocation2 + $0x80] sm:$0xff] %v509
      %564 = vst [vmem:[#allocation2 + $0x88] sm:$0xff] %v511
      %565 = vst [vmem:[#allocation2 + $0x90] sm:$0xff] %v513
      %566 = vst [vmem:[#allocation2 + $0x98] sm:$0xff] %v515
      %567 = vst [vmem:[#allocation2 + $0xa0] sm:$0xff] %v519
      %568 = vst [vmem:[#allocation2 + $0xa8] sm:$0xff] %v521
      %569 = vst [vmem:[#allocation2 + $0xb0] sm:$0xff] %v523
      %570 = vst [vmem:[#allocation2 + $0xb8] sm:$0xff] %v525
      %571 = vst [vmem:[#allocation2 + $0xc0] sm:$0xff] %v529
      %572 = vst [vmem:[#allocation2 + $0xc8] sm:$0xff] %v531
      %573 = vst [vmem:[#allocation2 + $0xd0] sm:$0xff] %v533
      %574 = vst [vmem:[#allocation2 + $0xd8] sm:$0xff] %v535
      %575 = vst [vmem:[#allocation2 + $0xe0] sm:$0xff] %v539
      %576 = vst [vmem:[#allocation2 + $0xe8] sm:$0xff] %v541
      %577 = vst [vmem:[#allocation2 + $0xf0] sm:$0xff] %v543
      %578 = vst [vmem:[#allocation2 + $0xf8] sm:$0xff] %v545
      %v579 = vld [vmem:[#allocation2] sm:$0xff]
      %v580 = vld [vmem:[#allocation2 + $0x8] sm:$0xff]
      %v581 = vld [vmem:[#allocation2 + $0x10] sm:$0xff]
      %v582 = vld [vmem:[#allocation2 + $0x18] sm:$0xff]
      %v583 = vld [vmem:[#allocation2 + $0x20] sm:$0xff]
      %v584 = vld [vmem:[#allocation2 + $0x28] sm:$0xff]
      %v585 = vld [vmem:[#allocation2 + $0x30] sm:$0xff]
      %v586 = vld [vmem:[#allocation2 + $0x38] sm:$0xff]
      %v587 = vadd.f32 %v579, %v580
      %588 = vadd.xlane.f32.xlu0 %v587
      %v589 = vpop.xlane.xlu0 %588
      %v590 = vadd.f32 %v581, %v582
      %591 = vadd.xlane.f32.xlu0 %v590
      %v592 = vpop.xlane.xlu0 %591
      %v593 = vadd.f32 %v583, %v584
      %594 = vadd.xlane.f32.xlu0 %v593
      %v595 = vpop.xlane.xlu0 %594
      %v596 = vadd.f32 %v585, %v586
      %597 = vadd.xlane.f32.xlu0 %v596
      %v598 = vpop.xlane.xlu0 %597
      %v599 = vadd.f32 %v589, %v592
      %v600 = vadd.f32 %v599, %v595
      %v601 = vadd.f32 %v600, %v598
      %v602 = vrot.slane %v601, 4
      %v603 = vadd.f32 %v601, %v602
      %v604 = vrot.slane %v603, 2
      %v605 = vadd.f32 %v603, %v604
      %v606 = vrot.slane %v605, 1
      %v607 = vadd.f32 %v605, %v606
      %v608 = vadd.f32 %v607, 0.0
      %v609 = vld [vmem:[#allocation2 + $0x40] sm:$0xff]
      %v610 = vld [vmem:[#allocation2 + $0x48] sm:$0xff]
      %v611 = vld [vmem:[#allocation2 + $0x50] sm:$0xff]
      %v612 = vld [vmem:[#allocation2 + $0x58] sm:$0xff]
      %v613 = vld [vmem:[#allocation2 + $0x60] sm:$0xff]
      %v614 = vld [vmem:[#allocation2 + $0x68] sm:$0xff]
      %v615 = vld [vmem:[#allocation2 + $0x70] sm:$0xff]
      %v616 = vld [vmem:[#allocation2 + $0x78] sm:$0xff]
      %v617 = vadd.f32 %v609, %v610
      %618 = vadd.xlane.f32.xlu0 %v617
      %v619 = vpop.xlane.xlu0 %618
      %v620 = vadd.f32 %v611, %v612
      %621 = vadd.xlane.f32.xlu0 %v620
      %v622 = vpop.xlane.xlu0 %621
      %v623 = vadd.f32 %v613, %v614
      %624 = vadd.xlane.f32.xlu0 %v623
      %v625 = vpop.xlane.xlu0 %624
      %v626 = vadd.f32 %v615, %v616
      %627 = vadd.xlane.f32.xlu0 %v626
      %v628 = vpop.xlane.xlu0 %627
      %v629 = vadd.f32 %v619, %v622
      %v630 = vadd.f32 %v629, %v625
      %v631 = vadd.f32 %v630, %v628
      %v632 = vrot.slane %v631, 4
      %v633 = vadd.f32 %v631, %v632
      %v634 = vrot.slane %v633, 2
      %v635 = vadd.f32 %v633, %v634
      %v636 = vrot.slane %v635, 1
      %v637 = vadd.f32 %v635, %v636
      %v638 = vadd.f32 %v608, %v637
      %v639 = vld [vmem:[#allocation2 + $0x80] sm:$0xff]
      %v640 = vld [vmem:[#allocation2 + $0x88] sm:$0xff]
      %v641 = vld [vmem:[#allocation2 + $0x90] sm:$0xff]
      %v642 = vld [vmem:[#allocation2 + $0x98] sm:$0xff]
      %v643 = vld [vmem:[#allocation2 + $0xa0] sm:$0xff]
      %v644 = vld [vmem:[#allocation2 + $0xa8] sm:$0xff]
      %v645 = vld [vmem:[#allocation2 + $0xb0] sm:$0xff]
      %v646 = vld [vmem:[#allocation2 + $0xb8] sm:$0xff]
      %v647 = vadd.f32 %v639, %v640
      %648 = vadd.xlane.f32.xlu0 %v647
      %v649 = vpop.xlane.xlu0 %648
      %v650 = vadd.f32 %v641, %v642
      %651 = vadd.xlane.f32.xlu0 %v650
      %v652 = vpop.xlane.xlu0 %651
      %v653 = vadd.f32 %v643, %v644
      %654 = vadd.xlane.f32.xlu0 %v653
      %v655 = vpop.xlane.xlu0 %654
      %v656 = vadd.f32 %v645, %v646
      %657 = vadd.xlane.f32.xlu0 %v656
      %v658 = vpop.xlane.xlu0 %657
      %v659 = vadd.f32 %v649, %v652
      %v660 = vadd.f32 %v659, %v655
      %v661 = vadd.f32 %v660, %v658
      %v662 = vrot.slane %v661, 4
      %v663 = vadd.f32 %v661, %v662
      %v664 = vrot.slane %v663, 2
      %v665 = vadd.f32 %v663, %v664
      %v666 = vrot.slane %v665, 1
      %v667 = vadd.f32 %v665, %v666
      %v668 = vadd.f32 %v638, %v667
      %v669 = vld [vmem:[#allocation2 + $0xc0] sm:$0xff]
      %v670 = vld [vmem:[#allocation2 + $0xc8] sm:$0xff]
      %v671 = vld [vmem:[#allocation2 + $0xd0] sm:$0xff]
      %v672 = vld [vmem:[#allocation2 + $0xd8] sm:$0xff]
      %v673 = vld [vmem:[#allocation2 + $0xe0] sm:$0xff]
      %v674 = vld [vmem:[#allocation2 + $0xe8] sm:$0xff]
      %v675 = vld [vmem:[#allocation2 + $0xf0] sm:$0xff]
      %v676 = vld [vmem:[#allocation2 + $0xf8] sm:$0xff]
      %v677 = vadd.f32 %v669, %v670
      %678 = vadd.xlane.f32.xlu0 %v677
      %v679 = vpop.xlane.xlu0 %678
      %v680 = vadd.f32 %v671, %v672
      %681 = vadd.xlane.f32.xlu0 %v680
      %v682 = vpop.xlane.xlu0 %681
      %v683 = vadd.f32 %v673, %v674
      %684 = vadd.xlane.f32.xlu0 %v683
      %v685 = vpop.xlane.xlu0 %684
      %v686 = vadd.f32 %v675, %v676
      %687 = vadd.xlane.f32.xlu0 %v686
      %v688 = vpop.xlane.xlu0 %687
      %v689 = vadd.f32 %v679, %v682
      %v690 = vadd.f32 %v689, %v685
      %v691 = vadd.f32 %v690, %v688
      %v692 = vrot.slane %v691, 4
      %v693 = vadd.f32 %v691, %v692
      %v694 = vrot.slane %v693, 2
      %v695 = vadd.f32 %v693, %v694
      %v696 = vrot.slane %v695, 1
      %v697 = vadd.f32 %v695, %v696
      %v698 = vadd.f32 %v668, %v697
      %v699 = vmul.f32 %v698, 3.0517578e-05
      %v700 = vsub.f32 %v579, %v699
      %v701 = vsub.f32 %v580, %v699
      %v702 = vsub.f32 %v581, %v699
      %v703 = vsub.f32 %v582, %v699
      %v704 = vsub.f32 %v583, %v699
      %v705 = vsub.f32 %v584, %v699
      %v706 = vsub.f32 %v585, %v699
      %v707 = vsub.f32 %v586, %v699
      %v708 = vmul.f32 %v700, %v700
      %v709 = vmul.f32 %v701, %v701
      %v710 = vmul.f32 %v702, %v702
      %v711 = vmul.f32 %v703, %v703
      %v712 = vmul.f32 %v704, %v704
      %v713 = vmul.f32 %v705, %v705
      %v714 = vmul.f32 %v706, %v706
      %v715 = vmul.f32 %v707, %v707
      %v716 = vadd.f32 %v708, %v709
      %717 = vadd.xlane.f32.xlu0 %v716
      %v718 = vpop.xlane.xlu0 %717
      %v719 = vadd.f32 %v710, %v711
      %720 = vadd.xlane.f32.xlu0 %v719
      %v721 = vpop.xlane.xlu0 %720
      %v722 = vadd.f32 %v712, %v713
      %723 = vadd.xlane.f32.xlu0 %v722
      %v724 = vpop.xlane.xlu0 %723
      %v725 = vadd.f32 %v714, %v715
      %726 = vadd.xlane.f32.xlu0 %v725
      %v727 = vpop.xlane.xlu0 %726
      %v728 = vadd.f32 %v718, %v721
      %v729 = vadd.f32 %v728, %v724
      %v730 = vadd.f32 %v729, %v727
      %v731 = vrot.slane %v730, 4
      %v732 = vadd.f32 %v730, %v731
      %v733 = vrot.slane %v732, 2
      %v734 = vadd.f32 %v732, %v733
      %v735 = vrot.slane %v734, 1
      %v736 = vadd.f32 %v734, %v735
      %v737 = vadd.f32 %v736, 0.0
      %v738 = vsub.f32 %v609, %v699
      %v739 = vsub.f32 %v610, %v699
      %v740 = vsub.f32 %v611, %v699
      %v741 = vsub.f32 %v612, %v699
      %v742 = vsub.f32 %v613, %v699
      %v743 = vsub.f32 %v614, %v699
      %v744 = vsub.f32 %v615, %v699
      %v745 = vsub.f32 %v616, %v699
      %v746 = vmul.f32 %v738, %v738
      %v747 = vmul.f32 %v739, %v739
      %v748 = vmul.f32 %v740, %v740
      %v749 = vmul.f32 %v741, %v741
      %v750 = vmul.f32 %v742, %v742
      %v751 = vmul.f32 %v743, %v743
      %v752 = vmul.f32 %v744, %v744
      %v753 = vmul.f32 %v745, %v745
      %v754 = vadd.f32 %v746, %v747
      %755 = vadd.xlane.f32.xlu0 %v754
      %v756 = vpop.xlane.xlu0 %755
      %v757 = vadd.f32 %v748, %v749
      %758 = vadd.xlane.f32.xlu0 %v757
      %v759 = vpop.xlane.xlu0 %758
      %v760 = vadd.f32 %v750, %v751
      %761 = vadd.xlane.f32.xlu0 %v760
      %v762 = vpop.xlane.xlu0 %761
      %v763 = vadd.f32 %v752, %v753
      %764 = vadd.xlane.f32.xlu0 %v763
      %v765 = vpop.xlane.xlu0 %764
      %v766 = vadd.f32 %v756, %v759
      %v767 = vadd.f32 %v766, %v762
      %v768 = vadd.f32 %v767, %v765
      %v769 = vrot.slane %v768, 4
      %v770 = vadd.f32 %v768, %v769
      %v771 = vrot.slane %v770, 2
      %v772 = vadd.f32 %v770, %v771
      %v773 = vrot.slane %v772, 1
      %v774 = vadd.f32 %v772, %v773
      %v775 = vadd.f32 %v737, %v774
      %v776 = vsub.f32 %v639, %v699
      %v777 = vsub.f32 %v640, %v699
      %v778 = vsub.f32 %v641, %v699
      %v779 = vsub.f32 %v642, %v699
      %v780 = vsub.f32 %v643, %v699
      %v781 = vsub.f32 %v644, %v699
      %v782 = vsub.f32 %v645, %v699
      %v783 = vsub.f32 %v646, %v699
      %v784 = vmul.f32 %v776, %v776
      %v785 = vmul.f32 %v777, %v777
      %v786 = vmul.f32 %v778, %v778
      %v787 = vmul.f32 %v779, %v779
      %v788 = vmul.f32 %v780, %v780
      %v789 = vmul.f32 %v781, %v781
      %v790 = vmul.f32 %v782, %v782
      %v791 = vmul.f32 %v783, %v783
      %v792 = vadd.f32 %v784, %v785
      %793 = vadd.xlane.f32.xlu0 %v792
      %v794 = vpop.xlane.xlu0 %793
      %v795 = vadd.f32 %v786, %v787
      %796 = vadd.xlane.f32.xlu0 %v795
      %v797 = vpop.xlane.xlu0 %796
      %v798 = vadd.f32 %v788, %v789
      %799 = vadd.xlane.f32.xlu0 %v798
      %v800 = vpop.xlane.xlu0 %799
      %v801 = vadd.f32 %v790, %v791
      %802 = vadd.xlane.f32.xlu0 %v801
      %v803 = vpop.xlane.xlu0 %802
      %v804 = vadd.f32 %v794, %v797
      %v805 = vadd.f32 %v804, %v800
      %v806 = vadd.f32 %v805, %v803
      %v807 = vrot.slane %v806, 4
      %v808 = vadd.f32 %v806, %v807
      %v809 = vrot.slane %v808, 2
      %v810 = vadd.f32 %v808, %v809
      %v811 = vrot.slane %v810, 1
      %v812 = vadd.f32 %v810, %v811
      %v813 = vadd.f32 %v775, %v812
      %v814 = vsub.f32 %v669, %v699
      %v815 = vsub.f32 %v670, %v699
      %v816 = vsub.f32 %v671, %v699
      %v817 = vsub.f32 %v672, %v699
      %v818 = vsub.f32 %v673, %v699
      %v819 = vsub.f32 %v674, %v699
      %v820 = vsub.f32 %v675, %v699
      %v821 = vsub.f32 %v676, %v699
      %v822 = vmul.f32 %v814, %v814
      %v823 = vmul.f32 %v815, %v815
      %v824 = vmul.f32 %v816, %v816
      %v825 = vmul.f32 %v817, %v817
      %v826 = vmul.f32 %v818, %v818
      %v827 = vmul.f32 %v819, %v819
      %v828 = vmul.f32 %v820, %v820
      %v829 = vmul.f32 %v821, %v821
      %v830 = vadd.f32 %v822, %v823
      %831 = vadd.xlane.f32.xlu0 %v830
      %v832 = vpop.xlane.xlu0 %831
      %v833 = vadd.f32 %v824, %v825
      %834 = vadd.xlane.f32.xlu0 %v833
      %v835 = vpop.xlane.xlu0 %834
      %v836 = vadd.f32 %v826, %v827
      %837 = vadd.xlane.f32.xlu0 %v836
      %v838 = vpop.xlane.xlu0 %837
      %v839 = vadd.f32 %v828, %v829
      %840 = vadd.xlane.f32.xlu0 %v839
      %v841 = vpop.xlane.xlu0 %840
      %v842 = vadd.f32 %v832, %v835
      %v843 = vadd.f32 %v842, %v838
      %v844 = vadd.f32 %v843, %v841
      %v845 = vrot.slane %v844, 4
      %v846 = vadd.f32 %v844, %v845
      %v847 = vrot.slane %v846, 2
      %v848 = vadd.f32 %v846, %v847
      %v849 = vrot.slane %v848, 1
      %v850 = vadd.f32 %v848, %v849
      %v851 = vadd.f32 %v813, %v850
      %v852 = vmul.f32 %v851, 3.0517578e-05
      %v853 = vadd.f32 %v852, 1e-05
      %v854 = vrsqrt.pop %v853
      %v855 = vld [vmem:[%s3] sm:$0xff]
      %v856 = vld [vmem:[%s3 + $0x8] sm:$0xff]
      %v857 = vld [vmem:[%s3 + $0x10] sm:$0xff]
      %v858 = vld [vmem:[%s3 + $0x18] sm:$0xff]
      %v859 = vld [vmem:[%s3 + $0x20] sm:$0xff]
      %v860 = vld [vmem:[%s3 + $0x28] sm:$0xff]
      %v861 = vld [vmem:[%s3 + $0x30] sm:$0xff]
      %v862 = vld [vmem:[%s3 + $0x38] sm:$0xff]
      %v863 = vld [vmem:[%s4] sm:$0xff]
      %v864 = vld [vmem:[%s4 + $0x8] sm:$0xff]
      %v865 = vld [vmem:[%s4 + $0x10] sm:$0xff]
      %v866 = vld [vmem:[%s4 + $0x18] sm:$0xff]
      %v867 = vld [vmem:[%s4 + $0x20] sm:$0xff]
      %v868 = vld [vmem:[%s4 + $0x28] sm:$0xff]
      %v869 = vld [vmem:[%s4 + $0x30] sm:$0xff]
      %v870 = vld [vmem:[%s4 + $0x38] sm:$0xff]
      %v871 = vmul.f32 %v700, %v854
      %v872 = vmul.f32 %v701, %v854
      %v873 = vmul.f32 %v702, %v854
      %v874 = vmul.f32 %v703, %v854
      %v875 = vmul.f32 %v704, %v854
      %v876 = vmul.f32 %v705, %v854
      %v877 = vmul.f32 %v706, %v854
      %v878 = vmul.f32 %v707, %v854
      %v879 = vmul.f32 %v871, %v855
      %v880 = vmul.f32 %v872, %v856
      %v881 = vmul.f32 %v873, %v857
      %v882 = vmul.f32 %v874, %v858
      %v883 = vmul.f32 %v875, %v859
      %v884 = vmul.f32 %v876, %v860
      %v885 = vmul.f32 %v877, %v861
      %v886 = vmul.f32 %v878, %v862
      %v887 = vadd.f32 %v879, %v863
      %v888 = vadd.f32 %v880, %v864
      %v889 = vadd.f32 %v881, %v865
      %v890 = vadd.f32 %v882, %v866
      %v891 = vadd.f32 %v883, %v867
      %v892 = vadd.f32 %v884, %v868
      %v893 = vadd.f32 %v885, %v869
      %v894 = vadd.f32 %v886, %v870
      %v895 = vpack.c.bf16 %v889, %v887
      %v896 = vpack.c.bf16 %v890, %v888
      %v897 = vpack.c.bf16 %v893, %v891
      %v898 = vpack.c.bf16 %v894, %v892
      %v903 = vunpack.c.l.b16 %v895
      %v904 = vunpack.c.l.b16 %v896
      %v905 = vunpack.c.h.b16 %v895
      %v906 = vunpack.c.h.b16 %v896
      %v907 = vunpack.c.l.b16 %v897
      %v908 = vunpack.c.l.b16 %v898
      %v909 = vunpack.c.h.b16 %v897
      %v910 = vunpack.c.h.b16 %v898
      %v911 = vpack.c.b16 %v904, %v903
      %v912 = vpack.c.b16 %v906, %v905
      %v913 = vpack.c.b16 %v908, %v907
      %v914 = vpack.c.b16 %v910, %v909
      %919 = vst [vmem:[%s224] sm:$0xff] %v911
      %920 = vst [vmem:[%s224 + $0x8] sm:$0xff] %v912
      %921 = vst [vmem:[%s224 + $0x10] sm:$0xff] %v913
      %922 = vst [vmem:[%s224 + $0x18] sm:$0xff] %v914
      %v923 = vld [vmem:[#allocation2 + $0x40] sm:$0xff]
      %v924 = vld [vmem:[#allocation2 + $0x48] sm:$0xff]
      %v925 = vld [vmem:[#allocation2 + $0x50] sm:$0xff]
      %v926 = vld [vmem:[#allocation2 + $0x58] sm:$0xff]
      %v927 = vld [vmem:[#allocation2 + $0x60] sm:$0xff]
      %v928 = vld [vmem:[#allocation2 + $0x68] sm:$0xff]
      %v929 = vld [vmem:[#allocation2 + $0x70] sm:$0xff]
      %v930 = vld [vmem:[#allocation2 + $0x78] sm:$0xff]
      %v931 = vsub.f32 %v923, %v699
      %v932 = vsub.f32 %v924, %v699
      %v933 = vsub.f32 %v925, %v699
      %v934 = vsub.f32 %v926, %v699
      %v935 = vsub.f32 %v927, %v699
      %v936 = vsub.f32 %v928, %v699
      %v937 = vsub.f32 %v929, %v699
      %v938 = vsub.f32 %v930, %v699
      %v939 = vld [vmem:[%s3 + $0x40] sm:$0xff]
      %v940 = vld [vmem:[%s3 + $0x48] sm:$0xff]
      %v941 = vld [vmem:[%s3 + $0x50] sm:$0xff]
      %v942 = vld [vmem:[%s3 + $0x58] sm:$0xff]
      %v943 = vld [vmem:[%s3 + $0x60] sm:$0xff]
      %v944 = vld [vmem:[%s3 + $0x68] sm:$0xff]
      %v945 = vld [vmem:[%s3 + $0x70] sm:$0xff]
      %v946 = vld [vmem:[%s3 + $0x78] sm:$0xff]
      %v947 = vld [vmem:[%s4 + $0x40] sm:$0xff]
      %v948 = vld [vmem:[%s4 + $0x48] sm:$0xff]
      %v949 = vld [vmem:[%s4 + $0x50] sm:$0xff]
      %v950 = vld [vmem:[%s4 + $0x58] sm:$0xff]
      %v951 = vld [vmem:[%s4 + $0x60] sm:$0xff]
      %v952 = vld [vmem:[%s4 + $0x68] sm:$0xff]
      %v953 = vld [vmem:[%s4 + $0x70] sm:$0xff]
      %v954 = vld [vmem:[%s4 + $0x78] sm:$0xff]
      %v955 = vmul.f32 %v931, %v854
      %v956 = vmul.f32 %v932, %v854
      %v957 = vmul.f32 %v933, %v854
      %v958 = vmul.f32 %v934, %v854
      %v959 = vmul.f32 %v935, %v854
      %v960 = vmul.f32 %v936, %v854
      %v961 = vmul.f32 %v937, %v854
      %v962 = vmul.f32 %v938, %v854
      %v963 = vmul.f32 %v955, %v939
      %v964 = vmul.f32 %v956, %v940
      %v965 = vmul.f32 %v957, %v941
      %v966 = vmul.f32 %v958, %v942
      %v967 = vmul.f32 %v959, %v943
      %v968 = vmul.f32 %v960, %v944
      %v969 = vmul.f32 %v961, %v945
      %v970 = vmul.f32 %v962, %v946
      %v971 = vadd.f32 %v963, %v947
      %v972 = vadd.f32 %v964, %v948
      %v973 = vadd.f32 %v965, %v949
      %v974 = vadd.f32 %v966, %v950
      %v975 = vadd.f32 %v967, %v951
      %v976 = vadd.f32 %v968, %v952
      %v977 = vadd.f32 %v969, %v953
      %v978 = vadd.f32 %v970, %v954
      %v979 = vpack.c.bf16 %v973, %v971
      %v980 = vpack.c.bf16 %v974, %v972
      %v981 = vpack.c.bf16 %v977, %v975
      %v982 = vpack.c.bf16 %v978, %v976
      %v987 = vunpack.c.l.b16 %v979
      %v988 = vunpack.c.l.b16 %v980
      %v989 = vunpack.c.h.b16 %v979
      %v990 = vunpack.c.h.b16 %v980
      %v991 = vunpack.c.l.b16 %v981
      %v992 = vunpack.c.l.b16 %v982
      %v993 = vunpack.c.h.b16 %v981
      %v994 = vunpack.c.h.b16 %v982
      %v995 = vpack.c.b16 %v988, %v987
      %v996 = vpack.c.b16 %v990, %v989
      %v997 = vpack.c.b16 %v992, %v991
      %v998 = vpack.c.b16 %v994, %v993
      %1003 = vst [vmem:[%s224 + $0x20] sm:$0xff] %v995
      %1004 = vst [vmem:[%s224 + $0x28] sm:$0xff] %v996
      %1005 = vst [vmem:[%s224 + $0x30] sm:$0xff] %v997
      %1006 = vst [vmem:[%s224 + $0x38] sm:$0xff] %v998
      %v1007 = vld [vmem:[#allocation2 + $0x80] sm:$0xff]
      %v1008 = vld [vmem:[#allocation2 + $0x88] sm:$0xff]
      %v1009 = vld [vmem:[#allocation2 + $0x90] sm:$0xff]
      %v1010 = vld [vmem:[#allocation2 + $0x98] sm:$0xff]
      %v1011 = vld [vmem:[#allocation2 + $0xa0] sm:$0xff]
      %v1012 = vld [vmem:[#allocation2 + $0xa8] sm:$0xff]
      %v1013 = vld [vmem:[#allocation2 + $0xb0] sm:$0xff]
      %v1014 = vld [vmem:[#allocation2 + $0xb8] sm:$0xff]
      %v1015 = vsub.f32 %v1007, %v699
      %v1016 = vsub.f32 %v1008, %v699
      %v1017 = vsub.f32 %v1009, %v699
      %v1018 = vsub.f32 %v1010, %v699
      %v1019 = vsub.f32 %v1011, %v699
      %v1020 = vsub.f32 %v1012, %v699
      %v1021 = vsub.f32 %v1013, %v699
      %v1022 = vsub.f32 %v1014, %v699
      %v1023 = vld [vmem:[%s3 + $0x80] sm:$0xff]
      %v1024 = vld [vmem:[%s3 + $0x88] sm:$0xff]
      %v1025 = vld [vmem:[%s3 + $0x90] sm:$0xff]
      %v1026 = vld [vmem:[%s3 + $0x98] sm:$0xff]
      %v1027 = vld [vmem:[%s3 + $0xa0] sm:$0xff]
      %v1028 = vld [vmem:[%s3 + $0xa8] sm:$0xff]
      %v1029 = vld [vmem:[%s3 + $0xb0] sm:$0xff]
      %v1030 = vld [vmem:[%s3 + $0xb8] sm:$0xff]
      %v1031 = vld [vmem:[%s4 + $0x80] sm:$0xff]
      %v1032 = vld [vmem:[%s4 + $0x88] sm:$0xff]
      %v1033 = vld [vmem:[%s4 + $0x90] sm:$0xff]
      %v1034 = vld [vmem:[%s4 + $0x98] sm:$0xff]
      %v1035 = vld [vmem:[%s4 + $0xa0] sm:$0xff]
      %v1036 = vld [vmem:[%s4 + $0xa8] sm:$0xff]
      %v1037 = vld [vmem:[%s4 + $0xb0] sm:$0xff]
      %v1038 = vld [vmem:[%s4 + $0xb8] sm:$0xff]
      %v1039 = vmul.f32 %v1015, %v854
      %v1040 = vmul.f32 %v1016, %v854
      %v1041 = vmul.f32 %v1017, %v854
      %v1042 = vmul.f32 %v1018, %v854
      %v1043 = vmul.f32 %v1019, %v854
      %v1044 = vmul.f32 %v1020, %v854
      %v1045 = vmul.f32 %v1021, %v854
      %v1046 = vmul.f32 %v1022, %v854
      %v1047 = vmul.f32 %v1039, %v1023
      %v1048 = vmul.f32 %v1040, %v1024
      %v1049 = vmul.f32 %v1041, %v1025
      %v1050 = vmul.f32 %v1042, %v1026
      %v1051 = vmul.f32 %v1043, %v1027
      %v1052 = vmul.f32 %v1044, %v1028
      %v1053 = vmul.f32 %v1045, %v1029
      %v1054 = vmul.f32 %v1046, %v1030
      %v1055 = vadd.f32 %v1047, %v1031
      %v1056 = vadd.f32 %v1048, %v1032
      %v1057 = vadd.f32 %v1049, %v1033
      %v1058 = vadd.f32 %v1050, %v1034
      %v1059 = vadd.f32 %v1051, %v1035
      %v1060 = vadd.f32 %v1052, %v1036
      %v1061 = vadd.f32 %v1053, %v1037
      %v1062 = vadd.f32 %v1054, %v1038
      %v1063 = vpack.c.bf16 %v1057, %v1055
      %v1064 = vpack.c.bf16 %v1058, %v1056
      %v1065 = vpack.c.bf16 %v1061, %v1059
      %v1066 = vpack.c.bf16 %v1062, %v1060
      %v1071 = vunpack.c.l.b16 %v1063
      %v1072 = vunpack.c.l.b16 %v1064
      %v1073 = vunpack.c.h.b16 %v1063
      %v1074 = vunpack.c.h.b16 %v1064
      %v1075 = vunpack.c.l.b16 %v1065
      %v1076 = vunpack.c.l.b16 %v1066
      %v1077 = vunpack.c.h.b16 %v1065
      %v1078 = vunpack.c.h.b16 %v1066
      %v1079 = vpack.c.b16 %v1072, %v1071
      %v1080 = vpack.c.b16 %v1074, %v1073
      %v1081 = vpack.c.b16 %v1076, %v1075
      %v1082 = vpack.c.b16 %v1078, %v1077
      %1087 = vst [vmem:[%s224 + $0x40] sm:$0xff] %v1079
      %1088 = vst [vmem:[%s224 + $0x48] sm:$0xff] %v1080
      %1089 = vst [vmem:[%s224 + $0x50] sm:$0xff] %v1081
      %1090 = vst [vmem:[%s224 + $0x58] sm:$0xff] %v1082
      %v1091 = vld [vmem:[#allocation2 + $0xc0] sm:$0xff]
      %v1092 = vld [vmem:[#allocation2 + $0xc8] sm:$0xff]
      %v1093 = vld [vmem:[#allocation2 + $0xd0] sm:$0xff]
      %v1094 = vld [vmem:[#allocation2 + $0xd8] sm:$0xff]
      %v1095 = vld [vmem:[#allocation2 + $0xe0] sm:$0xff]
      %v1096 = vld [vmem:[#allocation2 + $0xe8] sm:$0xff]
      %v1097 = vld [vmem:[#allocation2 + $0xf0] sm:$0xff]
      %v1098 = vld [vmem:[#allocation2 + $0xf8] sm:$0xff]
      %v1099 = vsub.f32 %v1091, %v699
      %v1100 = vsub.f32 %v1092, %v699
      %v1101 = vsub.f32 %v1093, %v699
      %v1102 = vsub.f32 %v1094, %v699
      %v1103 = vsub.f32 %v1095, %v699
      %v1104 = vsub.f32 %v1096, %v699
      %v1105 = vsub.f32 %v1097, %v699
      %v1106 = vsub.f32 %v1098, %v699
      %v1107 = vld [vmem:[%s3 + $0xc0] sm:$0xff]
      %v1108 = vld [vmem:[%s3 + $0xc8] sm:$0xff]
      %v1109 = vld [vmem:[%s3 + $0xd0] sm:$0xff]
      %v1110 = vld [vmem:[%s3 + $0xd8] sm:$0xff]
      %v1111 = vld [vmem:[%s3 + $0xe0] sm:$0xff]
      %v1112 = vld [vmem:[%s3 + $0xe8] sm:$0xff]
      %v1113 = vld [vmem:[%s3 + $0xf0] sm:$0xff]
      %v1114 = vld [vmem:[%s3 + $0xf8] sm:$0xff]
      %v1115 = vld [vmem:[%s4 + $0xc0] sm:$0xff]
      %v1116 = vld [vmem:[%s4 + $0xc8] sm:$0xff]
      %v1117 = vld [vmem:[%s4 + $0xd0] sm:$0xff]
      %v1118 = vld [vmem:[%s4 + $0xd8] sm:$0xff]
      %v1119 = vld [vmem:[%s4 + $0xe0] sm:$0xff]
      %v1120 = vld [vmem:[%s4 + $0xe8] sm:$0xff]
      %v1121 = vld [vmem:[%s4 + $0xf0] sm:$0xff]
      %v1122 = vld [vmem:[%s4 + $0xf8] sm:$0xff]
      %v1123 = vmul.f32 %v1099, %v854
      %v1124 = vmul.f32 %v1100, %v854
      %v1125 = vmul.f32 %v1101, %v854
      %v1126 = vmul.f32 %v1102, %v854
      %v1127 = vmul.f32 %v1103, %v854
      %v1128 = vmul.f32 %v1104, %v854
      %v1129 = vmul.f32 %v1105, %v854
      %v1130 = vmul.f32 %v1106, %v854
      %v1131 = vmul.f32 %v1123, %v1107
      %v1132 = vmul.f32 %v1124, %v1108
      %v1133 = vmul.f32 %v1125, %v1109
      %v1134 = vmul.f32 %v1126, %v1110
      %v1135 = vmul.f32 %v1127, %v1111
      %v1136 = vmul.f32 %v1128, %v1112
      %v1137 = vmul.f32 %v1129, %v1113
      %v1138 = vmul.f32 %v1130, %v1114
      %v1139 = vadd.f32 %v1131, %v1115
      %v1140 = vadd.f32 %v1132, %v1116
      %v1141 = vadd.f32 %v1133, %v1117
      %v1142 = vadd.f32 %v1134, %v1118
      %v1143 = vadd.f32 %v1135, %v1119
      %v1144 = vadd.f32 %v1136, %v1120
      %v1145 = vadd.f32 %v1137, %v1121
      %v1146 = vadd.f32 %v1138, %v1122
      %v1147 = vpack.c.bf16 %v1141, %v1139
      %v1148 = vpack.c.bf16 %v1142, %v1140
      %v1149 = vpack.c.bf16 %v1145, %v1143
      %v1150 = vpack.c.bf16 %v1146, %v1144
      %v1155 = vunpack.c.l.b16 %v1147
      %v1156 = vunpack.c.l.b16 %v1148
      %v1157 = vunpack.c.h.b16 %v1147
      %v1158 = vunpack.c.h.b16 %v1148
      %v1159 = vunpack.c.l.b16 %v1149
      %v1160 = vunpack.c.l.b16 %v1150
      %v1161 = vunpack.c.h.b16 %v1149
      %v1162 = vunpack.c.h.b16 %v1150
      %v1163 = vpack.c.b16 %v1156, %v1155
      %v1164 = vpack.c.b16 %v1158, %v1157
      %v1165 = vpack.c.b16 %v1160, %v1159
      %v1166 = vpack.c.b16 %v1162, %v1161
      %1171 = vst [vmem:[%s224 + $0x60] sm:$0xff] %v1163
      %1172 = vst [vmem:[%s224 + $0x68] sm:$0xff] %v1164
      %1173 = vst [vmem:[%s224 + $0x70] sm:$0xff] %v1165
      %1174 = vst [vmem:[%s224 + $0x78] sm:$0xff] %v1166
      %p1175 = scmp.lt.s32.totalorder %s16, 1
      %s1176 = scalar_select %p1175, %s16, 1
      %s1177 = smul.addr %s1176, 32
      %s1178 = smul.addr %s1177, 4
      %s1179 = scalar_lea.vmem %s5, %s1178
      // Predicated region
      $region41: #{primary_capsules_forward.1} parent=39 // pred_check
        %p1180 = pneg %p144
      $region42: #{primary_capsules_forward.1} parent=39 // pred_check_branch
        %1182 = sbr.rel (%p1180) target = $region44
      $region43: #{primary_capsules_forward.1} parent=39 // pred_region
        _
      $region44: #{primary_capsules_forward.1} parent=39 // pred_fallthru
        _
    $region40: #{primary_capsules_forward.1} parent=5 // pred_fallthru
      _
    %p1183 = scmp.le.s32.totalorder 2, %s11
    // Predicated region
    $region45: #{primary_capsules_forward.1} parent=5 // pred_check
      %p1184 = pneg %p1183
    $region46: #{primary_capsules_forward.1} parent=5 // pred_check_branch
      %1186 = sbr.rel (%p1184) target = $region48
    $region47: #{primary_capsules_forward.1} parent=5 // pred_region
      %s1187 = ssub.s32 %s11, 2
      // Predicated region
      $region49: #{primary_capsules_forward.1} parent=47 // pred_check
        %p1188 = pneg %p150
      $region50: #{primary_capsules_forward.1} parent=47 // pred_check_branch
        %1190 = sbr.rel (%p1188) target = $region52
      $region51: #{primary_capsules_forward.1} parent=47 // pred_region
        %p1191 = scmp.lt.s32.totalorder %s17, 1
        %s1192 = scalar_select %p1191, %s17, 1
        %s1193 = smul.addr %s1192, 32
        %s1194 = smul.addr %s1193, 4
        %s1195 = scalar_lea.vmem %s5, %s1194
      $region52: #{primary_capsules_forward.1} parent=47 // pred_fallthru
        _
    $region48: #{primary_capsules_forward.1} parent=5 // pred_fallthru
      _
  $region6: #{primary_capsules_forward.1} parent=0 // loop_footer
    %s15 = sadd.s32 1, %s11
  $region7: #{primary_capsules_forward.1} parent=0 // loop_footer_branch
    %10 = sbr.rel target = $region3
  $region8: #{primary_capsules_forward.1} parent=0 // loop_exit
    _

</llo_original>
